<compile_context>
chip_gen: v6e
topology: v6e:2x2x1
jax: 0.10.0
libtpu: 0.0.40
codegen_flags: <defaults>
</compile_context>

<pallas_src>
import numpy as np
import jax
import jax.numpy as jnp
from jax.experimental import pallas as pl


# ---------------------------------------------------------------------------
# Problem geometry.
# ---------------------------------------------------------------------------
N_FACES, N_XYZ = 6, 3
_LVL_IN = (8, 11, 18)            # per-plane coeff size: level 3 (coarsest), 2, 1
_GAIN = (1.0, 0.1, 0.01)         # torch zip([lvl1,lvl2,lvl3],[0.01,0.1,1.0]) reversed
_OUT = 32

_DET_ROWS = tuple(N_XYZ * 2 * h for h in _LVL_IN)     # (48, 66, 108)  sublane groups
_DET_COLS = tuple(N_FACES * 2 * h for h in _LVL_IN)   # (96, 132, 216) lane groups
_ROW_OFF = tuple(int(v) for v in np.concatenate([[0], np.cumsum(_DET_ROWS)[:-1]]))
_COL_OFF = tuple(int(v) for v in np.concatenate([[0], np.cumsum(_DET_COLS)[:-1]]))
_KDET = sum(_DET_ROWS)           # 222
_KDET_PAD = 224                  # zero-pad rows to a multiple of 8 (exact)
_NDET = sum(_DET_COLS)           # 444


# ---------------------------------------------------------------------------
# db3 reconstruction filters (pywt.Wavelet('db3').rec_lo / rec_hi), hard-coded.
# ---------------------------------------------------------------------------
_DB3_DEC_LO = np.array([
    0.035226291882100656, -0.08544127388224149, -0.13501102001039084,
    0.4598775021193313, 0.8068915093133388, 0.3326705529509569,
], dtype=np.float64)
_DB3_REC_LO = _DB3_DEC_LO[::-1].copy()                    # == pywt rec_lo
_DB3_REC_HI = _DB3_DEC_LO * ((-1.0) ** np.arange(6))      # == pywt rec_hi


def _synthesis_matrix(n_in, filt):
    """M (n_out, n_in): M @ c == conv_transpose1d(c, filt, stride=2, padding=L-2).

    Reproduces pytorch_wavelets sfb1d for every non-periodization mode
    (including mode='symmetric' used by the reference module).
    """
    L = len(filt)
    n_out = 2 * n_in - (L - 2)
    M = np.zeros((n_out, n_in), dtype=np.float64)
    for k in range(n_in):
        for j in range(L):
            m = 2 * k + j - (L - 2)
            if 0 <= m < n_out:
                M[m, k] += filt[j]
    return M


# ---------------------------------------------------------------------------
# Offline-precomposed constant slabs.
# ---------------------------------------------------------------------------
def _build_constants():
    s0_3f = _synthesis_matrix(8, _DB3_REC_LO)             # (12, 8)
    s1_3f = _synthesis_matrix(8, _DB3_REC_HI)
    s0_3, s1_3 = s0_3f[:11], s1_3f[:11]                    # fold 12 -> 11 crop
    s0_2 = _synthesis_matrix(11, _DB3_REC_LO)              # (18, 11)
    s1_2 = _synthesis_matrix(11, _DB3_REC_HI)
    s0_1 = _synthesis_matrix(18, _DB3_REC_LO)              # (32, 18)
    s1_1 = _synthesis_matrix(18, _DB3_REC_HI)

    # Per-plane synthesis chains (lowpass of all finer levels pushed through).
    b3 = s0_1 @ s0_2 @ s0_3        # (32, 8)   carries Yl / level-3 lowpass side
    a3 = s0_1 @ s0_2 @ s1_3        # (32, 8)
    b2 = s0_1 @ s0_2               # (32, 11)
    a2 = s0_1 @ s1_2               # (32, 11)
    b1 = s0_1                      # (32, 18)
    a1 = s1_1                      # (32, 18)

    eye_x = np.eye(N_XYZ)          # xyz channels -> sublane groups (left side)
    eye_f = np.eye(N_FACES)        # faces        -> lane groups   (right side)

    def left(w):
        return np.kron(eye_x, w)

    def right(v):
        return np.kron(eye_f, v)

    # Yl term:  B3 @ yl @ B3^T  (no tanh, no gain).
    l_yl = left(b3)                                        # (96, 24)
    v_yl = right(b3.T)                                     # (48, 192)

    # Detail levels: per plane  [B|A] @ [[0, hl],[lh, hh]] @ [[g B^T],[g A^T]]
    #   = g * (A lh B^T + B hl A^T + A hh A^T)   -- exactly SFB2D's band roles.
    def level_mats(b, a, g):
        return np.hstack([b, a]), g * np.vstack([b.T, a.T])

    w3, v3 = level_mats(b3, a3, _GAIN[0])
    w2, v2 = level_mats(b2, a2, _GAIN[1])
    w1, v1 = level_mats(b1, a1, _GAIN[2])

    # Detail slab is block-diagonal across levels, so left/right constants just
    # concatenate along the contraction dims (all fusion done offline).
    l_det = np.hstack([left(w3), left(w2), left(w1)])      # (96, 222)
    l_det = np.pad(l_det, ((0, 0), (0, _KDET_PAD - _KDET)))  # (96, 224)
    v_det = np.vstack([right(v3), right(v2), right(v1)])   # (444, 192)

    return tuple(np.asarray(m, np.float32) for m in (l_yl, l_det, v_yl, v_det))


_MATS = _build_constants()


# ---------------------------------------------------------------------------
# Pallas kernel: entire 3-level inverse DWT as 4 matmuls + tanh.
# ---------------------------------------------------------------------------
def _idwt_kernel(yl_ref, zdet_ref, l_yl_ref, l_det_ref, v_yl_ref, v_det_ref,
                 out_ref):
    def mm(a, b):
        return jnp.dot(a, b, preferred_element_type=jnp.float32)

    # Row (H-axis) synthesis: xyz block-diagonal folded into the left constants.
    # tanh (EUP) touches only the detail slab -- Yl bypasses it, as in torch.
    p_yl = mm(l_yl_ref[...], yl_ref[...])                   # (96, 48)
    p_det = mm(l_det_ref[...], jnp.tanh(zdet_ref[...]))     # (96, 444)
    # Column (W-axis) synthesis: face block-diagonal folded into right constants.
    out_ref[...] = mm(p_yl, v_yl_ref[...]) + mm(p_det, v_det_ref[...])  # (96, 192)


def idwt3_db3(yl_slab, zdet, mats):
    l_yl, l_det, v_yl, v_det = mats
    flops = 2 * (96 * 24 * 48 + 96 * _KDET_PAD * _NDET +
                 96 * 48 * 192 + 96 * _NDET * 192)
    bytes_accessed = 4 * (yl_slab.size + zdet.size +
                          sum(int(m.size) for m in mats) + 96 * 192)
    return pl.pallas_call(
        _idwt_kernel,
        out_shape=jax.ShapeDtypeStruct((N_XYZ * _OUT, N_FACES * _OUT), jnp.float32),
        cost_estimate=pl.CostEstimate(flops=int(flops),
                                      transcendentals=int(zdet.size),
                                      bytes_accessed=int(bytes_accessed)),
    )(yl_slab, zdet, l_yl, l_det, v_yl, v_det)


# ---------------------------------------------------------------------------
# Wrapper-side layout plumbing (tiny XLA ops on parameters, not the hot path).
# ---------------------------------------------------------------------------
def _detail_block(param, h):
    """(6,3,3,h,h) -> (3*2h, 6*2h): per-plane [[0, hl],[lh, hh]] block,
    xyz on sublane groups, faces on lane groups."""
    lh, hl, hh = param[:, :, 0], param[:, :, 1], param[:, :, 2]   # (6,3,h,h)
    zero = jnp.zeros_like(lh)
    top = jnp.concatenate([zero, hl], axis=-1)                    # (6,3,h,2h)
    bot = jnp.concatenate([lh, hh], axis=-1)
    blk = jnp.concatenate([top, bot], axis=-2)                    # (6,3,2h,2h)
    blk = jnp.transpose(blk, (1, 2, 0, 3))                        # (3,2h,6,2h)
    return blk.reshape(N_XYZ * 2 * h, N_FACES * 2 * h)


def _pack_details(lvl3, lvl2, lvl1):
    z = jnp.zeros((_KDET_PAD, _NDET), jnp.float32)
    for param, h, r0, c0 in ((lvl3, _LVL_IN[0], _ROW_OFF[0], _COL_OFF[0]),
                             (lvl2, _LVL_IN[1], _ROW_OFF[1], _COL_OFF[1]),
                             (lvl1, _LVL_IN[2], _ROW_OFF[2], _COL_OFF[2])):
        blk = _detail_block(param, h)
        z = z.at[r0:r0 + blk.shape[0], c0:c0 + blk.shape[1]].set(blk)
    return z


# ---------------------------------------------------------------------------
# Glue helpers (not provided in the source module).
# ---------------------------------------------------------------------------
def sphered_vertices(n, r):
    # TODO(synk): exact helper not in the provided source; plausible cube->sphere grid.
    lin = np.linspace(-1.0, 1.0, n)
    u, v = np.meshgrid(lin, lin, indexing='ij')
    ones = np.ones_like(u)
    faces = [
        np.stack([ones, u, v], 0), np.stack([-ones, u, v], 0),
        np.stack([u, ones, v], 0), np.stack([u, -ones, v], 0),
        np.stack([u, v, ones], 0), np.stack([u, v, -ones], 0),
    ]
    pts = np.stack(faces, 0)                                  # (6, 3, n, n)
    pts = pts / np.linalg.norm(pts, axis=1, keepdims=True) * r
    return jnp.asarray(pts, jnp.float32)


def make_cube_faces(n):
    # TODO(synk): exact helper not in the provided source; standard quad triangulation.
    tris = []
    for f in range(6):
        base = f * n * n
        for i in range(n - 1):
            for j in range(n - 1):
                v = base + i * n + j
                tris.append((v, v + 1, v + n))
                tris.append((v + 1, v + n + 1, v + n))
    return jnp.asarray(np.array(tris, dtype=np.int32))


def to_vertices(stacked):
    # TODO(synk): exact helper not in the provided source; (6,3,H,W) -> (6*H*W, 3) xyz list.
    return jnp.transpose(stacked, (0, 2, 3, 1)).reshape(-1, 3)


# ---------------------------------------------------------------------------
# WaveGenerator forward.
# ---------------------------------------------------------------------------
def wave_generator_forward(coarse, lvl1, lvl2, lvl3, faces):
    # Yl: (6,3,8,8) -> (24, 48): xyz on sublane groups, faces on lane groups.
    yl_slab = jnp.transpose(coarse, (1, 2, 0, 3)).reshape(N_XYZ * 8, N_FACES * 8)
    zdet = _pack_details(lvl3, lvl2, lvl1)                       # (224, 444)
    mats = tuple(jnp.asarray(m) for m in _MATS)

    out = idwt3_db3(yl_slab, zdet, mats)                         # (96, 192)
    stacked = out.reshape(N_XYZ, _OUT, N_FACES, _OUT).transpose(2, 0, 1, 3)
    vert = to_vertices(stacked)
    return vert, faces, stacked


# ---------------------------------------------------------------------------
# Float64 numpy reference: faithful DWTInverse (chained, uncomposed).
# ---------------------------------------------------------------------------
def _reference_forward(coarse, lvl1, lvl2, lvl3):
    s0 = {n: _synthesis_matrix(n, _DB3_REC_LO) for n in _LVL_IN}
    s1 = {n: _synthesis_matrix(n, _DB3_REC_HI) for n in _LVL_IN}
    yh = [np.tanh(np.asarray(p, np.float64)) * g
          for p, g in ((lvl1, 0.01), (lvl2, 0.1), (lvl3, 1.0))]
    coarse = np.asarray(coarse, np.float64)
    out = np.zeros((N_FACES, N_XYZ, _OUT, _OUT))
    for f in range(N_FACES):
        for x in range(N_XYZ):
            ll = coarse[f, x]
            for h in yh[::-1]:                      # coarsest level first
                hb = h[f, x]                        # (3, n, n) = (lh, hl, hh)
                n = hb.shape[-1]
                ll = ll[:n, :n]                     # DWTInverse 'unpad'
                lo = s0[n] @ ll + s1[n] @ hb[0]
                hi = s0[n] @ hb[1] + s1[n] @ hb[2]
                ll = lo @ s0[n].T + hi @ s1[n].T
            out[f, x] = ll
    return out


if __name__ == "__main__":
    n = 32
    r = 0.5
    scale = 0.01

    key = jax.random.PRNGKey(0)
    k1, k2, k3 = jax.random.split(key, 3)
    lvl1 = jax.random.normal(k1, (6, 3, 3, 18, 18), jnp.float32) * scale
    lvl2 = jax.random.normal(k2, (6, 3, 3, 11, 11), jnp.float32) * scale
    lvl3 = jax.random.normal(k3, (6, 3, 3, 8, 8), jnp.float32) * scale
    coarse = sphered_vertices(8, r)              # (6, 3, 8, 8)  == Yl
    faces = make_cube_faces(n)

    fwd = jax.jit(wave_generator_forward)
    vert, faces_out, stacked = fwd(coarse, lvl1, lvl2, lvl3, faces)
    jax.block_until_ready((vert, faces_out, stacked))

    assert stacked.shape == (6, 3, 32, 32)
    assert vert.shape == (6 * 32 * 32, 3)
    assert bool(jnp.all(jnp.isfinite(stacked)))

    # Check against an exact float64 re-implementation of DWTInverse.
    # Generous bound (covers any MXU f32-emulation mode); typically ~1e-5.
    ref = _reference_forward(np.asarray(coarse), np.asarray(lvl1),
                             np.asarray(lvl2), np.asarray(lvl3))
    err = float(np.max(np.abs(np.asarray(stacked, np.float64) - ref)))
    assert err < 2e-2, f"max abs error vs float64 reference: {err}"

    print("KERNEL_OK")
</pallas_src>

<mosaic_0001>
module attributes {stable_mosaic.version = 11 : i64} {
  func.func @_idwt_kernel(%arg0: memref<24x48xf32, #tpu.memory_space<vmem>>, %arg1: memref<224x444xf32, #tpu.memory_space<vmem>>, %arg2: memref<96x24xf32, #tpu.memory_space<vmem>>, %arg3: memref<96x224xf32, #tpu.memory_space<vmem>>, %arg4: memref<48x192xf32, #tpu.memory_space<vmem>>, %arg5: memref<444x192xf32, #tpu.memory_space<vmem>>, %arg6: memref<96x192xf32, #tpu.memory_space<vmem>>) attributes {dimension_semantics = [], scalar_prefetch = 0 : i64, scratch_operands = 0 : i64, tpu.core_type = #tpu.core_type<tc>} {
    %c0 = arith.constant 0 : index
    %c0_0 = arith.constant 0 : index
    %0 = vector.load %arg2[%c0, %c0_0] : memref<96x24xf32, #tpu.memory_space<vmem>>, vector<96x24xf32>
    %c0_1 = arith.constant 0 : index
    %c0_2 = arith.constant 0 : index
    %1 = vector.load %arg0[%c0_1, %c0_2] : memref<24x48xf32, #tpu.memory_space<vmem>>, vector<24x48xf32>
    %cst = arith.constant dense<0.000000e+00> : vector<96x48xf32>
    %2 = tpu.matmul %0, %1, %cst {dimension_numbers = #tpu.dot_dimension_numbers<[1], [0], [0], [1], [0, 0, 1, 1], [], []>} : vector<96x24xf32>, vector<24x48xf32>, vector<96x48xf32> -> vector<96x48xf32>
    %c0_3 = arith.constant 0 : index
    %c0_4 = arith.constant 0 : index
    %3 = vector.load %arg3[%c0_3, %c0_4] : memref<96x224xf32, #tpu.memory_space<vmem>>, vector<96x224xf32>
    %c0_5 = arith.constant 0 : index
    %c0_6 = arith.constant 0 : index
    %4 = vector.load %arg1[%c0_5, %c0_6] : memref<224x444xf32, #tpu.memory_space<vmem>>, vector<224x444xf32>
    %5 = math.tanh %4 : vector<224x444xf32>
    %cst_7 = arith.constant dense<0.000000e+00> : vector<96x444xf32>
    %6 = tpu.matmul %3, %5, %cst_7 {dimension_numbers = #tpu.dot_dimension_numbers<[1], [0], [0], [1], [0, 0, 1, 1], [], []>} : vector<96x224xf32>, vector<224x444xf32>, vector<96x444xf32> -> vector<96x444xf32>
    %c0_8 = arith.constant 0 : index
    %c0_9 = arith.constant 0 : index
    %7 = vector.load %arg4[%c0_8, %c0_9] : memref<48x192xf32, #tpu.memory_space<vmem>>, vector<48x192xf32>
    %cst_10 = arith.constant dense<0.000000e+00> : vector<96x192xf32>
    %8 = tpu.matmul %2, %7, %cst_10 {dimension_numbers = #tpu.dot_dimension_numbers<[1], [0], [0], [1], [0, 0, 1, 1], [], []>} : vector<96x48xf32>, vector<48x192xf32>, vector<96x192xf32> -> vector<96x192xf32>
    %c0_11 = arith.constant 0 : index
    %c0_12 = arith.constant 0 : index
    %9 = vector.load %arg5[%c0_11, %c0_12] : memref<444x192xf32, #tpu.memory_space<vmem>>, vector<444x192xf32>
    %cst_13 = arith.constant dense<0.000000e+00> : vector<96x192xf32>
    %10 = tpu.matmul %6, %9, %cst_13 {dimension_numbers = #tpu.dot_dimension_numbers<[1], [0], [0], [1], [0, 0, 1, 1], [], []>} : vector<96x444xf32>, vector<444x192xf32>, vector<96x192xf32> -> vector<96x192xf32>
    %11 = arith.addf %8, %10 : vector<96x192xf32>
    %c0_14 = arith.constant 0 : index
    %c0_15 = arith.constant 0 : index
    %12 = vector.load %arg6[%c0_14, %c0_15] : memref<96x192xf32, #tpu.memory_space<vmem>>, vector<96x192xf32>
    tpu.vector_store %arg6[%c0_14, %c0_15], %11 {strides = array<i32>} : memref<96x192xf32, #tpu.memory_space<vmem>>, vector<96x192xf32>,
    return
  }
}

</mosaic_0001>

<llo_original>
// kernel: wave_generator_forward.1
$region0: #{wave_generator_forward.1}
  #allocation0 [shape = 'u32[]', space=smem, size = 0x4, offset = 0x4, fixed_abs, tag = 'smem constant byte address 0x4 - core index']
  #allocation1 [shape = 'u32[144,128]{1,0:T(1,128)}', space=vmem, size = 0x12000, scoped, tag = 'internal scratch']
  %s0 = inlined_call_operand.vmem [shape: f32[24,48], index: 0, kind: input, shape index: {}]
  %s1 = inlined_call_operand.vmem [shape: f32[224,444], index: 1, kind: input, shape index: {}]
  %s2 = inlined_call_operand.vmem [shape: f32[96,24], index: 2, kind: input, shape index: {}]
  %s3 = inlined_call_operand.vmem [shape: f32[96,224], index: 3, kind: input, shape index: {}]
  %s4 = inlined_call_operand.vmem [shape: f32[48,192], index: 4, kind: input, shape index: {}]
  %s5 = inlined_call_operand.vmem [shape: f32[444,192], index: 5, kind: input, shape index: {}]
  %s6 = inlined_call_operand.vmem [shape: f32[96,192], index: 6, kind: output, shape index: {}]
  %s7 = sld [smem:[#allocation0]]
  $region34: #{wave_generator_forward.1} parent=0
    _
  %s9 = ssub.s32 1, %s7
  %s10 = scalar_select 0, %s9, %s7
  // Predicated region
  $region2: #{wave_generator_forward.1} parent=0 // pred_check
    _
  $region3: #{wave_generator_forward.1} parent=0 // pred_check_branch
    %12 = sbr.rel (0) target = $region5
  $region4: #{wave_generator_forward.1} parent=0 // pred_region
    _
  $region5: #{wave_generator_forward.1} parent=0 // pred_fallthru
    _
  // Predicated region
  $region6: #{wave_generator_forward.1} parent=0 // pred_check
    _
  $region7: #{wave_generator_forward.1} parent=0 // pred_check_branch
    %14 = sbr.rel (0) target = $region9
  $region8: #{wave_generator_forward.1} parent=0 // pred_region
    _
  $region9: #{wave_generator_forward.1} parent=0 // pred_fallthru
    _
  // Predicated region
  $region10: #{wave_generator_forward.1} parent=0 // pred_check
    _
  $region11: #{wave_generator_forward.1} parent=0 // pred_check_branch
    %16 = sbr.rel (0) target = $region13
  $region12: #{wave_generator_forward.1} parent=0 // pred_region
    _
  $region13: #{wave_generator_forward.1} parent=0 // pred_fallthru
    _
  // Predicated region
  $region14: #{wave_generator_forward.1} parent=0 // pred_check
    _
  $region15: #{wave_generator_forward.1} parent=0 // pred_check_branch
    %18 = sbr.rel (0) target = $region17
  $region16: #{wave_generator_forward.1} parent=0 // pred_region
    _
  $region17: #{wave_generator_forward.1} parent=0 // pred_fallthru
    _
  // Predicated region
  $region18: #{wave_generator_forward.1} parent=0 // pred_check
    _
  $region19: #{wave_generator_forward.1} parent=0 // pred_check_branch
    %20 = sbr.rel (0) target = $region21
  $region20: #{wave_generator_forward.1} parent=0 // pred_region
    _
  $region21: #{wave_generator_forward.1} parent=0 // pred_fallthru
    _
  // Predicated region
  $region22: #{wave_generator_forward.1} parent=0 // pred_check
    _
  $region23: #{wave_generator_forward.1} parent=0 // pred_check_branch
    %22 = sbr.rel (0) target = $region25
  $region24: #{wave_generator_forward.1} parent=0 // pred_region
    _
  $region25: #{wave_generator_forward.1} parent=0 // pred_fallthru
    _
  %v23 = vld [vmem:[%s2] sm:$0xff]
  %v24 = vld [vmem:[%s2 + $0x8] sm:$0xff]
  %v25 = vld [vmem:[%s2 + $0x10] sm:$0xff]
  %v26 = vld [vmem:[%s2 + $0x18] sm:$0xff]
  %v27 = vld [vmem:[%s2 + $0x20] sm:$0xff]
  %v28 = vld [vmem:[%s2 + $0x28] sm:$0xff]
  %v29 = vld [vmem:[%s2 + $0x30] sm:$0xff]
  %v30 = vld [vmem:[%s2 + $0x38] sm:$0xff]
  %v31 = vld [vmem:[%s2 + $0x40] sm:$0xff]
  %v32 = vld [vmem:[%s2 + $0x48] sm:$0xff]
  %v33 = vld [vmem:[%s2 + $0x50] sm:$0xff]
  %v34 = vld [vmem:[%s2 + $0x58] sm:$0xff]
  %v35 = vld [vmem:[%s0] sm:$0xff]
  %v36 = vld [vmem:[%s0 + $0x8] sm:$0xff]
  %v37 = vld [vmem:[%s0 + $0x10] sm:$0xff]
  %vm38 = vcmask 195584
  %v40 = vsel %vm38, %v23, 0
  %v43 = vsel %vm38, %v24, 0
  %v46 = vsel %vm38, %v25, 0
  %v49 = vsel %vm38, %v26, 0
  %v52 = vsel %vm38, %v27, 0
  %v55 = vsel %vm38, %v28, 0
  %v58 = vsel %vm38, %v29, 0
  %v61 = vsel %vm38, %v30, 0
  %v64 = vsel %vm38, %v31, 0
  %v67 = vsel %vm38, %v32, 0
  %v70 = vsel %vm38, %v33, 0
  %v73 = vsel %vm38, %v34, 0
  %75 = vmatprep.subr.mxu0 0.0
  %76 = vmatpush1.msra.mxu0 0.0
  %77 = vmatprep.subr.mxu0 0.0
  %78 = vmatpush1.msra.mxu0 0.0
  %79 = vmatprep.subr.mxu0 0.0
  %80 = vmatpush1.msra.mxu0 0.0
  %81 = vmatprep.subr.mxu0 0.0
  %82 = vmatpush1.msra.mxu0 0.0
  %83 = vmatprep.subr.mxu0 0.0
  %84 = vmatpush1.msra.mxu0 0.0
  %85 = vmatprep.subr.mxu0 0.0
  %86 = vmatpush1.msra.mxu0 0.0
  %87 = vmatprep.subr.mxu0 0.0
  %88 = vmatpush1.msra.mxu0 0.0
  %89 = vmatprep.subr.mxu0 0.0
  %90 = vmatpush1.msra.mxu0 0.0
  %91 = vmatprep.subr.mxu0 0.0
  %92 = vmatpush1.msra.mxu0 0.0
  %93 = vmatprep.subr.mxu0 0.0
  %94 = vmatpush1.msra.mxu0 0.0
  %95 = vmatprep.subr.mxu0 0.0
  %96 = vmatpush1.msra.mxu0 0.0
  %97 = vmatprep.subr.mxu0 0.0
  %98 = vmatpush1.msra.mxu0 0.0
  %99 = vmatprep.subr.mxu0 0.0
  %100 = vmatpush1.msra.mxu0 0.0
  %101 = vmatprep.subr.mxu0 0.0
  %102 = vmatpush1.msra.mxu0 %v37
  %103 = vmatprep.subr.mxu0 0.0
  %104 = vmatpush1.msra.mxu0 %v36
  %105 = vmatprep.subr.mxu0 0.0
  %106 = vmatpush1.msra.mxu0 %v35
  %107 = vmatprep.subr.mxu0 0.0
  %108 = vmatpush2.msra.mxu0 0.0
  %109 = vmatprep.subr.mxu0 0.0
  %110 = vmatpush2.msra.mxu0 0.0
  %111 = vmatprep.subr.mxu0 0.0
  %112 = vmatpush2.msra.mxu0 0.0
  %113 = vmatprep.subr.mxu0 0.0
  %114 = vmatpush2.msra.mxu0 0.0
  %115 = vmatprep.subr.mxu0 0.0
  %116 = vmatpush2.msra.mxu0 0.0
  %117 = vmatprep.subr.mxu0 0.0
  %118 = vmatpush2.msra.mxu0 0.0
  %119 = vmatprep.subr.mxu0 0.0
  %120 = vmatpush2.msra.mxu0 0.0
  %121 = vmatprep.subr.mxu0 0.0
  %122 = vmatpush2.msra.mxu0 0.0
  %123 = vmatprep.subr.mxu0 0.0
  %124 = vmatpush2.msra.mxu0 0.0
  %125 = vmatprep.subr.mxu0 0.0
  %126 = vmatpush2.msra.mxu0 0.0
  %127 = vmatprep.subr.mxu0 0.0
  %128 = vmatpush2.msra.mxu0 0.0
  %129 = vmatprep.subr.mxu0 0.0
  %130 = vmatpush2.msra.mxu0 0.0
  %131 = vmatprep.subr.mxu0 0.0
  %132 = vmatpush2.msra.mxu0 0.0
  %133 = vmatprep.subr.mxu0 0.0
  %134 = vmatpush2.msra.mxu0 0.0
  %135 = vmatprep.subr.mxu0 0.0
  %136 = vmatpush2.msra.mxu0 0.0
  %137 = vmatprep.subr.mxu0 0.0
  %138 = vmatpush2.msra.mxu0 0.0
  %139 = vmatprep.mubr.f32.mxu0 0.0
  %140 = vmatmul.mubr.f32.gmra.mxu0 %v40
  %v141 = vpop.f32.mrf.mxu0
  %v142 = vadd.f32 0.0, %v141
  %v143 = vpop.f32.mrf.mxu0
  %144 = vmatprep.mubr.f32.mxu0 0.0
  %145 = vmatmul.mubr.f32.gmra.mxu0 %v43
  %v146 = vpop.f32.mrf.mxu0
  %v147 = vadd.f32 0.0, %v146
  %v148 = vpop.f32.mrf.mxu0
  %149 = vmatprep.mubr.f32.mxu0 0.0
  %150 = vmatmul.mubr.f32.gmra.mxu0 %v46
  %v151 = vpop.f32.mrf.mxu0
  %v152 = vadd.f32 0.0, %v151
  %v153 = vpop.f32.mrf.mxu0
  %154 = vmatprep.mubr.f32.mxu0 0.0
  %155 = vmatmul.mubr.f32.gmra.mxu0 %v49
  %v156 = vpop.f32.mrf.mxu0
  %v157 = vadd.f32 0.0, %v156
  %v158 = vpop.f32.mrf.mxu0
  %159 = vmatprep.mubr.f32.mxu0 0.0
  %160 = vmatmul.mubr.f32.gmra.mxu0 %v52
  %v161 = vpop.f32.mrf.mxu0
  %v162 = vadd.f32 0.0, %v161
  %v163 = vpop.f32.mrf.mxu0
  %164 = vmatprep.mubr.f32.mxu0 0.0
  %165 = vmatmul.mubr.f32.gmra.mxu0 %v55
  %v166 = vpop.f32.mrf.mxu0
  %v167 = vadd.f32 0.0, %v166
  %v168 = vpop.f32.mrf.mxu0
  %169 = vmatprep.mubr.f32.mxu0 0.0
  %170 = vmatmul.mubr.f32.gmra.mxu0 %v58
  %v171 = vpop.f32.mrf.mxu0
  %v172 = vadd.f32 0.0, %v171
  %v173 = vpop.f32.mrf.mxu0
  %174 = vmatprep.mubr.f32.mxu0 0.0
  %175 = vmatmul.mubr.f32.gmra.mxu0 %v61
  %v176 = vpop.f32.mrf.mxu0
  %v177 = vadd.f32 0.0, %v176
  %v178 = vpop.f32.mrf.mxu0
  %179 = vmatprep.mubr.f32.mxu0 0.0
  %180 = vmatmul.mubr.f32.gmra.mxu0 %v64
  %v181 = vpop.f32.mrf.mxu0
  %v182 = vadd.f32 0.0, %v181
  %v183 = vpop.f32.mrf.mxu0
  %184 = vmatprep.mubr.f32.mxu0 0.0
  %185 = vmatmul.mubr.f32.gmra.mxu0 %v67
  %v186 = vpop.f32.mrf.mxu0
  %v187 = vadd.f32 0.0, %v186
  %v188 = vpop.f32.mrf.mxu0
  %189 = vmatprep.mubr.f32.mxu0 0.0
  %190 = vmatmul.mubr.f32.gmra.mxu0 %v70
  %v191 = vpop.f32.mrf.mxu0
  %v192 = vadd.f32 0.0, %v191
  %v193 = vpop.f32.mrf.mxu0
  %194 = vmatprep.mubr.f32.mxu0 0.0
  %195 = vmatmul.mubr.f32.gmra.mxu0 %v73
  %v196 = vpop.f32.mrf.mxu0
  %v197 = vadd.f32 0.0, %v196
  %v198 = vpop.f32.mrf.mxu0
  %199 = vdwg.mxu0
  %v200 = vld [vmem:[%s3] sm:$0xff]
  %v201 = vld [vmem:[%s3 + $0x8] sm:$0xff]
  %v202 = vld [vmem:[%s3 + $0x10] sm:$0xff]
  %v203 = vld [vmem:[%s3 + $0x18] sm:$0xff]
  %v204 = vld [vmem:[%s3 + $0x20] sm:$0xff]
  %v205 = vld [vmem:[%s3 + $0x28] sm:$0xff]
  %v206 = vld [vmem:[%s3 + $0x30] sm:$0xff]
  %v207 = vld [vmem:[%s3 + $0x38] sm:$0xff]
  %v208 = vld [vmem:[%s3 + $0x40] sm:$0xff]
  %v209 = vld [vmem:[%s3 + $0x48] sm:$0xff]
  %v210 = vld [vmem:[%s3 + $0x50] sm:$0xff]
  %v211 = vld [vmem:[%s3 + $0x58] sm:$0xff]
  %v212 = vld [vmem:[%s3 + $0x60] sm:$0xff]
  %v213 = vld [vmem:[%s3 + $0x68] sm:$0xff]
  %v214 = vld [vmem:[%s3 + $0x70] sm:$0xff]
  %v215 = vld [vmem:[%s3 + $0x78] sm:$0xff]
  %v216 = vld [vmem:[%s3 + $0x80] sm:$0xff]
  %v217 = vld [vmem:[%s3 + $0x88] sm:$0xff]
  %v218 = vld [vmem:[%s3 + $0x90] sm:$0xff]
  %v219 = vld [vmem:[%s3 + $0x98] sm:$0xff]
  %v220 = vld [vmem:[%s3 + $0xa0] sm:$0xff]
  %v221 = vld [vmem:[%s3 + $0xa8] sm:$0xff]
  %v222 = vld [vmem:[%s3 + $0xb0] sm:$0xff]
  %v223 = vld [vmem:[%s3 + $0xb8] sm:$0xff]
  %v224 = vld [vmem:[%s1] sm:$0xff]
  %v225 = vld [vmem:[%s1 + $0x8] sm:$0xff]
  %v226 = vld [vmem:[%s1 + $0x10] sm:$0xff]
  %v227 = vld [vmem:[%s1 + $0x18] sm:$0xff]
  %v228 = vld [vmem:[%s1 + $0x20] sm:$0xff]
  %v229 = vld [vmem:[%s1 + $0x28] sm:$0xff]
  %v230 = vld [vmem:[%s1 + $0x30] sm:$0xff]
  %v231 = vld [vmem:[%s1 + $0x38] sm:$0xff]
  %v232 = vld [vmem:[%s1 + $0x40] sm:$0xff]
  %v233 = vld [vmem:[%s1 + $0x48] sm:$0xff]
  %v234 = vld [vmem:[%s1 + $0x50] sm:$0xff]
  %v235 = vld [vmem:[%s1 + $0x58] sm:$0xff]
  %v236 = vld [vmem:[%s1 + $0x60] sm:$0xff]
  %v237 = vld [vmem:[%s1 + $0x68] sm:$0xff]
  %v238 = vld [vmem:[%s1 + $0x70] sm:$0xff]
  %v239 = vld [vmem:[%s1 + $0x78] sm:$0xff]
  %v240 = vld [vmem:[%s1 + $0x80] sm:$0xff]
  %v241 = vld [vmem:[%s1 + $0x88] sm:$0xff]
  %v242 = vld [vmem:[%s1 + $0x90] sm:$0xff]
  %v243 = vld [vmem:[%s1 + $0x98] sm:$0xff]
  %v244 = vld [vmem:[%s1 + $0xa0] sm:$0xff]
  %v245 = vld [vmem:[%s1 + $0xa8] sm:$0xff]
  %v246 = vld [vmem:[%s1 + $0xb0] sm:$0xff]
  %v247 = vld [vmem:[%s1 + $0xb8] sm:$0xff]
  %v248 = vld [vmem:[%s1 + $0xc0] sm:$0xff]
  %v249 = vld [vmem:[%s1 + $0xc8] sm:$0xff]
  %v250 = vld [vmem:[%s1 + $0xd0] sm:$0xff]
  %v251 = vld [vmem:[%s1 + $0xd8] sm:$0xff]
  %v252 = vld [vmem:[%s1 + $0xe0] sm:$0xff]
  %v253 = vld [vmem:[%s1 + $0xe8] sm:$0xff]
  %v254 = vld [vmem:[%s1 + $0xf0] sm:$0xff]
  %v255 = vld [vmem:[%s1 + $0xf8] sm:$0xff]
  %v256 = vld [vmem:[%s1 + $0x100] sm:$0xff]
  %v257 = vld [vmem:[%s1 + $0x108] sm:$0xff]
  %v258 = vld [vmem:[%s1 + $0x110] sm:$0xff]
  %v259 = vld [vmem:[%s1 + $0x118] sm:$0xff]
  %v260 = vld [vmem:[%s1 + $0x120] sm:$0xff]
  %v261 = vld [vmem:[%s1 + $0x128] sm:$0xff]
  %v262 = vld [vmem:[%s1 + $0x130] sm:$0xff]
  %v263 = vld [vmem:[%s1 + $0x138] sm:$0xff]
  %v264 = vld [vmem:[%s1 + $0x140] sm:$0xff]
  %v265 = vld [vmem:[%s1 + $0x148] sm:$0xff]
  %v266 = vld [vmem:[%s1 + $0x150] sm:$0xff]
  %v267 = vld [vmem:[%s1 + $0x158] sm:$0xff]
  %v268 = vld [vmem:[%s1 + $0x160] sm:$0xff]
  %v269 = vld [vmem:[%s1 + $0x168] sm:$0xff]
  %v270 = vld [vmem:[%s1 + $0x170] sm:$0xff]
  %v271 = vld [vmem:[%s1 + $0x178] sm:$0xff]
  %v272 = vld [vmem:[%s1 + $0x180] sm:$0xff]
  %v273 = vld [vmem:[%s1 + $0x188] sm:$0xff]
  %v274 = vld [vmem:[%s1 + $0x190] sm:$0xff]
  %v275 = vld [vmem:[%s1 + $0x198] sm:$0xff]
  %v276 = vld [vmem:[%s1 + $0x1a0] sm:$0xff]
  %v277 = vld [vmem:[%s1 + $0x1a8] sm:$0xff]
  %v278 = vld [vmem:[%s1 + $0x1b0] sm:$0xff]
  %v279 = vld [vmem:[%s1 + $0x1b8] sm:$0xff]
  %v280 = vld [vmem:[%s1 + $0x1c0] sm:$0xff]
  %v281 = vld [vmem:[%s1 + $0x1c8] sm:$0xff]
  %v282 = vld [vmem:[%s1 + $0x1d0] sm:$0xff]
  %v283 = vld [vmem:[%s1 + $0x1d8] sm:$0xff]
  %v284 = vld [vmem:[%s1 + $0x1e0] sm:$0xff]
  %v285 = vld [vmem:[%s1 + $0x1e8] sm:$0xff]
  %v286 = vld [vmem:[%s1 + $0x1f0] sm:$0xff]
  %v287 = vld [vmem:[%s1 + $0x1f8] sm:$0xff]
  %v288 = vld [vmem:[%s1 + $0x200] sm:$0xff]
  %v289 = vld [vmem:[%s1 + $0x208] sm:$0xff]
  %v290 = vld [vmem:[%s1 + $0x210] sm:$0xff]
  %v291 = vld [vmem:[%s1 + $0x218] sm:$0xff]
  %v292 = vld [vmem:[%s1 + $0x220] sm:$0xff]
  %v293 = vld [vmem:[%s1 + $0x228] sm:$0xff]
  %v294 = vld [vmem:[%s1 + $0x230] sm:$0xff]
  %v295 = vld [vmem:[%s1 + $0x238] sm:$0xff]
  %v296 = vld [vmem:[%s1 + $0x240] sm:$0xff]
  %v297 = vld [vmem:[%s1 + $0x248] sm:$0xff]
  %v298 = vld [vmem:[%s1 + $0x250] sm:$0xff]
  %v299 = vld [vmem:[%s1 + $0x258] sm:$0xff]
  %v300 = vld [vmem:[%s1 + $0x260] sm:$0xff]
  %v301 = vld [vmem:[%s1 + $0x268] sm:$0xff]
  %v302 = vld [vmem:[%s1 + $0x270] sm:$0xff]
  %v303 = vld [vmem:[%s1 + $0x278] sm:$0xff]
  %v304 = vld [vmem:[%s1 + $0x280] sm:$0xff]
  %v305 = vld [vmem:[%s1 + $0x288] sm:$0xff]
  %v306 = vld [vmem:[%s1 + $0x290] sm:$0xff]
  %v307 = vld [vmem:[%s1 + $0x298] sm:$0xff]
  %v308 = vld [vmem:[%s1 + $0x2a0] sm:$0xff]
  %v309 = vld [vmem:[%s1 + $0x2a8] sm:$0xff]
  %v310 = vld [vmem:[%s1 + $0x2b0] sm:$0xff]
  %v311 = vld [vmem:[%s1 + $0x2b8] sm:$0xff]
  %v312 = vld [vmem:[%s1 + $0x2c0] sm:$0xff]
  %v313 = vld [vmem:[%s1 + $0x2c8] sm:$0xff]
  %v314 = vld [vmem:[%s1 + $0x2d0] sm:$0xff]
  %v315 = vld [vmem:[%s1 + $0x2d8] sm:$0xff]
  %v316 = vld [vmem:[%s1 + $0x2e0] sm:$0xff]
  %v317 = vld [vmem:[%s1 + $0x2e8] sm:$0xff]
  %v318 = vld [vmem:[%s1 + $0x2f0] sm:$0xff]
  %v319 = vld [vmem:[%s1 + $0x2f8] sm:$0xff]
  %v320 = vld [vmem:[%s1 + $0x300] sm:$0xff]
  %v321 = vld [vmem:[%s1 + $0x308] sm:$0xff]
  %v322 = vld [vmem:[%s1 + $0x310] sm:$0xff]
  %v323 = vld [vmem:[%s1 + $0x318] sm:$0xff]
  %v324 = vld [vmem:[%s1 + $0x320] sm:$0xff]
  %v325 = vld [vmem:[%s1 + $0x328] sm:$0xff]
  %v326 = vld [vmem:[%s1 + $0x330] sm:$0xff]
  %v327 = vld [vmem:[%s1 + $0x338] sm:$0xff]
  %v328 = vld [vmem:[%s1 + $0x340] sm:$0xff]
  %v329 = vld [vmem:[%s1 + $0x348] sm:$0xff]
  %v330 = vld [vmem:[%s1 + $0x350] sm:$0xff]
  %v331 = vld [vmem:[%s1 + $0x358] sm:$0xff]
  %v332 = vld [vmem:[%s1 + $0x360] sm:$0xff]
  %v333 = vld [vmem:[%s1 + $0x368] sm:$0xff]
  %v334 = vld [vmem:[%s1 + $0x370] sm:$0xff]
  %v335 = vld [vmem:[%s1 + $0x378] sm:$0xff]
  %v336 = vtanh.pop %v224
  %v337 = vtanh.pop %v225
  %v338 = vtanh.pop %v226
  %v339 = vtanh.pop %v227
  %v340 = vtanh.pop %v228
  %v341 = vtanh.pop %v229
  %v342 = vtanh.pop %v230
  %v343 = vtanh.pop %v231
  %v344 = vtanh.pop %v232
  %v345 = vtanh.pop %v233
  %v346 = vtanh.pop %v234
  %v347 = vtanh.pop %v235
  %v348 = vtanh.pop %v236
  %v349 = vtanh.pop %v237
  %v350 = vtanh.pop %v238
  %v351 = vtanh.pop %v239
  %v352 = vtanh.pop %v240
  %v353 = vtanh.pop %v241
  %v354 = vtanh.pop %v242
  %v355 = vtanh.pop %v243
  %v356 = vtanh.pop %v244
  %v357 = vtanh.pop %v245
  %v358 = vtanh.pop %v246
  %v359 = vtanh.pop %v247
  %v360 = vtanh.pop %v248
  %v361 = vtanh.pop %v249
  %v362 = vtanh.pop %v250
  %v363 = vtanh.pop %v251
  %v364 = vtanh.pop %v252
  %v365 = vtanh.pop %v253
  %v366 = vtanh.pop %v254
  %v367 = vtanh.pop %v255
  %v368 = vtanh.pop %v256
  %v369 = vtanh.pop %v257
  %v370 = vtanh.pop %v258
  %v371 = vtanh.pop %v259
  %v372 = vtanh.pop %v260
  %v373 = vtanh.pop %v261
  %v374 = vtanh.pop %v262
  %v375 = vtanh.pop %v263
  %v376 = vtanh.pop %v264
  %v377 = vtanh.pop %v265
  %v378 = vtanh.pop %v266
  %v379 = vtanh.pop %v267
  %v380 = vtanh.pop %v268
  %v381 = vtanh.pop %v269
  %v382 = vtanh.pop %v270
  %v383 = vtanh.pop %v271
  %v384 = vtanh.pop %v272
  %v385 = vtanh.pop %v273
  %v386 = vtanh.pop %v274
  %v387 = vtanh.pop %v275
  %v388 = vtanh.pop %v276
  %v389 = vtanh.pop %v277
  %v390 = vtanh.pop %v278
  %v391 = vtanh.pop %v279
  %v392 = vtanh.pop %v280
  %v393 = vtanh.pop %v281
  %v394 = vtanh.pop %v282
  %v395 = vtanh.pop %v283
  %v396 = vtanh.pop %v284
  %v397 = vtanh.pop %v285
  %v398 = vtanh.pop %v286
  %v399 = vtanh.pop %v287
  %v400 = vtanh.pop %v288
  %v401 = vtanh.pop %v289
  %v402 = vtanh.pop %v290
  %v403 = vtanh.pop %v291
  %v404 = vtanh.pop %v292
  %v405 = vtanh.pop %v293
  %v406 = vtanh.pop %v294
  %v407 = vtanh.pop %v295
  %v408 = vtanh.pop %v296
  %v409 = vtanh.pop %v297
  %v410 = vtanh.pop %v298
  %v411 = vtanh.pop %v299
  %v412 = vtanh.pop %v300
  %v413 = vtanh.pop %v301
  %v414 = vtanh.pop %v302
  %v415 = vtanh.pop %v303
  %v416 = vtanh.pop %v304
  %v417 = vtanh.pop %v305
  %v418 = vtanh.pop %v306
  %v419 = vtanh.pop %v307
  %v420 = vtanh.pop %v308
  %v421 = vtanh.pop %v309
  %v422 = vtanh.pop %v310
  %v423 = vtanh.pop %v311
  %v424 = vtanh.pop %v312
  %v425 = vtanh.pop %v313
  %v426 = vtanh.pop %v314
  %v427 = vtanh.pop %v315
  %v428 = vtanh.pop %v316
  %v429 = vtanh.pop %v317
  %v430 = vtanh.pop %v318
  %v431 = vtanh.pop %v319
  %v432 = vtanh.pop %v320
  %v433 = vtanh.pop %v321
  %v434 = vtanh.pop %v322
  %v435 = vtanh.pop %v323
  %v436 = vtanh.pop %v324
  %v437 = vtanh.pop %v325
  %v438 = vtanh.pop %v326
  %v439 = vtanh.pop %v327
  %v440 = vtanh.pop %v328
  %v441 = vtanh.pop %v329
  %v442 = vtanh.pop %v330
  %v443 = vtanh.pop %v331
  %v444 = vtanh.pop %v332
  %v445 = vtanh.pop %v333
  %v446 = vtanh.pop %v334
  %v447 = vtanh.pop %v335
  %vm448 = vcmask 785408
  %v450 = vsel %vm448, %v201, 0
  %v453 = vsel %vm448, %v203, 0
  %v456 = vsel %vm448, %v205, 0
  %v459 = vsel %vm448, %v207, 0
  %v462 = vsel %vm448, %v209, 0
  %v465 = vsel %vm448, %v211, 0
  %v468 = vsel %vm448, %v213, 0
  %v471 = vsel %vm448, %v215, 0
  %v474 = vsel %vm448, %v217, 0
  %v477 = vsel %vm448, %v219, 0
  %v480 = vsel %vm448, %v221, 0
  %v483 = vsel %vm448, %v223, 0
  %485 = vmatprep.subr.mxu0 %v397
  %486 = vmatpush1.msra.mxu0 %v396
  %487 = vmatprep.subr.mxu0 %v393
  %488 = vmatpush1.msra.mxu0 %v392
  %489 = vmatprep.subr.mxu0 %v389
  %490 = vmatpush1.msra.mxu0 %v388
  %491 = vmatprep.subr.mxu0 %v385
  %492 = vmatpush1.msra.mxu0 %v384
  %493 = vmatprep.subr.mxu0 %v381
  %494 = vmatpush1.msra.mxu0 %v380
  %495 = vmatprep.subr.mxu0 %v377
  %496 = vmatpush1.msra.mxu0 %v376
  %497 = vmatprep.subr.mxu0 %v373
  %498 = vmatpush1.msra.mxu0 %v372
  %499 = vmatprep.subr.mxu0 %v369
  %500 = vmatpush1.msra.mxu0 %v368
  %501 = vmatprep.subr.mxu0 %v365
  %502 = vmatpush1.msra.mxu0 %v364
  %503 = vmatprep.subr.mxu0 %v361
  %504 = vmatpush1.msra.mxu0 %v360
  %505 = vmatprep.subr.mxu0 %v357
  %506 = vmatpush1.msra.mxu0 %v356
  %507 = vmatprep.subr.mxu0 %v353
  %508 = vmatpush1.msra.mxu0 %v352
  %509 = vmatprep.subr.mxu0 %v349
  %510 = vmatpush1.msra.mxu0 %v348
  %511 = vmatprep.subr.mxu0 %v345
  %512 = vmatpush1.msra.mxu0 %v344
  %513 = vmatprep.subr.mxu0 %v341
  %514 = vmatpush1.msra.mxu0 %v340
  %515 = vmatprep.subr.mxu0 %v337
  %516 = vmatpush1.msra.mxu0 %v336
  %517 = vmatprep.subr.mxu0 0.0
  %518 = vmatpush2.msra.mxu0 0.0
  %519 = vmatprep.subr.mxu0 0.0
  %520 = vmatpush2.msra.mxu0 0.0
  %521 = vmatprep.subr.mxu0 0.0
  %522 = vmatpush2.msra.mxu0 0.0
  %523 = vmatprep.subr.mxu0 0.0
  %524 = vmatpush2.msra.mxu0 0.0
  %525 = vmatprep.subr.mxu0 %v445
  %526 = vmatpush2.msra.mxu0 %v444
  %527 = vmatprep.subr.mxu0 %v441
  %528 = vmatpush2.msra.mxu0 %v440
  %529 = vmatprep.subr.mxu0 %v437
  %530 = vmatpush2.msra.mxu0 %v436
  %531 = vmatprep.subr.mxu0 %v433
  %532 = vmatpush2.msra.mxu0 %v432
  %533 = vmatprep.subr.mxu0 %v429
  %534 = vmatpush2.msra.mxu0 %v428
  %535 = vmatprep.subr.mxu0 %v425
  %536 = vmatpush2.msra.mxu0 %v424
  %537 = vmatprep.subr.mxu0 %v421
  %538 = vmatpush2.msra.mxu0 %v420
  %539 = vmatprep.subr.mxu0 %v417
  %540 = vmatpush2.msra.mxu0 %v416
  %541 = vmatprep.subr.mxu0 %v413
  %542 = vmatpush2.msra.mxu0 %v412
  %543 = vmatprep.subr.mxu0 %v409
  %544 = vmatpush2.msra.mxu0 %v408
  %545 = vmatprep.subr.mxu0 %v405
  %546 = vmatpush2.msra.mxu0 %v404
  %547 = vmatprep.subr.mxu0 %v401
  %548 = vmatpush2.msra.mxu0 %v400
  %549 = vmatprep.mubr.f32.mxu0 %v450
  %550 = vmatmul.mubr.f32.gmra.mxu0 %v200
  %v551 = vpop.f32.mrf.mxu0
  %v552 = vadd.f32 0.0, %v551
  %v553 = vpop.f32.mrf.mxu0
  %v554 = vadd.f32 0.0, %v553
  %555 = vmatprep.mubr.f32.mxu0 %v453
  %556 = vmatmul.mubr.f32.gmra.mxu0 %v202
  %v557 = vpop.f32.mrf.mxu0
  %v558 = vadd.f32 0.0, %v557
  %v559 = vpop.f32.mrf.mxu0
  %v560 = vadd.f32 0.0, %v559
  %561 = vmatprep.mubr.f32.mxu0 %v456
  %562 = vmatmul.mubr.f32.gmra.mxu0 %v204
  %v563 = vpop.f32.mrf.mxu0
  %v564 = vadd.f32 0.0, %v563
  %v565 = vpop.f32.mrf.mxu0
  %v566 = vadd.f32 0.0, %v565
  %567 = vmatprep.mubr.f32.mxu0 %v459
  %568 = vmatmul.mubr.f32.gmra.mxu0 %v206
  %v569 = vpop.f32.mrf.mxu0
  %v570 = vadd.f32 0.0, %v569
  %v571 = vpop.f32.mrf.mxu0
  %v572 = vadd.f32 0.0, %v571
  %573 = vmatprep.mubr.f32.mxu0 %v462
  %574 = vmatmul.mubr.f32.gmra.mxu0 %v208
  %v575 = vpop.f32.mrf.mxu0
  %v576 = vadd.f32 0.0, %v575
  %v577 = vpop.f32.mrf.mxu0
  %v578 = vadd.f32 0.0, %v577
  %579 = vmatprep.mubr.f32.mxu0 %v465
  %580 = vmatmul.mubr.f32.gmra.mxu0 %v210
  %v581 = vpop.f32.mrf.mxu0
  %v582 = vadd.f32 0.0, %v581
  %v583 = vpop.f32.mrf.mxu0
  %v584 = vadd.f32 0.0, %v583
  %585 = vmatprep.mubr.f32.mxu0 %v468
  %586 = vmatmul.mubr.f32.gmra.mxu0 %v212
  %v587 = vpop.f32.mrf.mxu0
  %v588 = vadd.f32 0.0, %v587
  %v589 = vpop.f32.mrf.mxu0
  %v590 = vadd.f32 0.0, %v589
  %591 = vmatprep.mubr.f32.mxu0 %v471
  %592 = vmatmul.mubr.f32.gmra.mxu0 %v214
  %v593 = vpop.f32.mrf.mxu0
  %v594 = vadd.f32 0.0, %v593
  %v595 = vpop.f32.mrf.mxu0
  %v596 = vadd.f32 0.0, %v595
  %597 = vmatprep.mubr.f32.mxu0 %v474
  %598 = vmatmul.mubr.f32.gmra.mxu0 %v216
  %v599 = vpop.f32.mrf.mxu0
  %v600 = vadd.f32 0.0, %v599
  %v601 = vpop.f32.mrf.mxu0
  %v602 = vadd.f32 0.0, %v601
  %603 = vmatprep.mubr.f32.mxu0 %v477
  %604 = vmatmul.mubr.f32.gmra.mxu0 %v218
  %v605 = vpop.f32.mrf.mxu0
  %v606 = vadd.f32 0.0, %v605
  %v607 = vpop.f32.mrf.mxu0
  %v608 = vadd.f32 0.0, %v607
  %609 = vmatprep.mubr.f32.mxu0 %v480
  %610 = vmatmul.mubr.f32.gmra.mxu0 %v220
  %v611 = vpop.f32.mrf.mxu0
  %v612 = vadd.f32 0.0, %v611
  %v613 = vpop.f32.mrf.mxu0
  %v614 = vadd.f32 0.0, %v613
  %615 = vmatprep.mubr.f32.mxu0 %v483
  %616 = vmatmul.mubr.f32.gmra.mxu0 %v222
  %v617 = vpop.f32.mrf.mxu0
  %v618 = vadd.f32 0.0, %v617
  %v619 = vpop.f32.mrf.mxu0
  %v620 = vadd.f32 0.0, %v619
  %621 = vdwg.mxu0
  %622 = vmatprep.subr.mxu0 %v399
  %623 = vmatpush1.msra.mxu0 %v398
  %624 = vmatprep.subr.mxu0 %v395
  %625 = vmatpush1.msra.mxu0 %v394
  %626 = vmatprep.subr.mxu0 %v391
  %627 = vmatpush1.msra.mxu0 %v390
  %628 = vmatprep.subr.mxu0 %v387
  %629 = vmatpush1.msra.mxu0 %v386
  %630 = vmatprep.subr.mxu0 %v383
  %631 = vmatpush1.msra.mxu0 %v382
  %632 = vmatprep.subr.mxu0 %v379
  %633 = vmatpush1.msra.mxu0 %v378
  %634 = vmatprep.subr.mxu0 %v375
  %635 = vmatpush1.msra.mxu0 %v374
  %636 = vmatprep.subr.mxu0 %v371
  %637 = vmatpush1.msra.mxu0 %v370
  %638 = vmatprep.subr.mxu0 %v367
  %639 = vmatpush1.msra.mxu0 %v366
  %640 = vmatprep.subr.mxu0 %v363
  %641 = vmatpush1.msra.mxu0 %v362
  %642 = vmatprep.subr.mxu0 %v359
  %643 = vmatpush1.msra.mxu0 %v358
  %644 = vmatprep.subr.mxu0 %v355
  %645 = vmatpush1.msra.mxu0 %v354
  %646 = vmatprep.subr.mxu0 %v351
  %647 = vmatpush1.msra.mxu0 %v350
  %648 = vmatprep.subr.mxu0 %v347
  %649 = vmatpush1.msra.mxu0 %v346
  %650 = vmatprep.subr.mxu0 %v343
  %651 = vmatpush1.msra.mxu0 %v342
  %652 = vmatprep.subr.mxu0 %v339
  %653 = vmatpush1.msra.mxu0 %v338
  %654 = vmatprep.subr.mxu0 0.0
  %655 = vmatpush2.msra.mxu0 0.0
  %656 = vmatprep.subr.mxu0 0.0
  %657 = vmatpush2.msra.mxu0 0.0
  %658 = vmatprep.subr.mxu0 0.0
  %659 = vmatpush2.msra.mxu0 0.0
  %660 = vmatprep.subr.mxu0 0.0
  %661 = vmatpush2.msra.mxu0 0.0
  %662 = vmatprep.subr.mxu0 %v447
  %663 = vmatpush2.msra.mxu0 %v446
  %664 = vmatprep.subr.mxu0 %v443
  %665 = vmatpush2.msra.mxu0 %v442
  %666 = vmatprep.subr.mxu0 %v439
  %667 = vmatpush2.msra.mxu0 %v438
  %668 = vmatprep.subr.mxu0 %v435
  %669 = vmatpush2.msra.mxu0 %v434
  %670 = vmatprep.subr.mxu0 %v431
  %671 = vmatpush2.msra.mxu0 %v430
  %672 = vmatprep.subr.mxu0 %v427
  %673 = vmatpush2.msra.mxu0 %v426
  %674 = vmatprep.subr.mxu0 %v423
  %675 = vmatpush2.msra.mxu0 %v422
  %676 = vmatprep.subr.mxu0 %v419
  %677 = vmatpush2.msra.mxu0 %v418
  %678 = vmatprep.subr.mxu0 %v415
  %679 = vmatpush2.msra.mxu0 %v414
  %680 = vmatprep.subr.mxu0 %v411
  %681 = vmatpush2.msra.mxu0 %v410
  %682 = vmatprep.subr.mxu0 %v407
  %683 = vmatpush2.msra.mxu0 %v406
  %684 = vmatprep.subr.mxu0 %v403
  %685 = vmatpush2.msra.mxu0 %v402
  %686 = vmatprep.mubr.f32.mxu0 %v450
  %687 = vmatmul.mubr.f32.gmra.mxu0 %v200
  %v688 = vpop.f32.mrf.mxu0
  %v689 = vadd.f32 0.0, %v688
  %v690 = vpop.f32.mrf.mxu0
  %v691 = vadd.f32 0.0, %v690
  %692 = vmatprep.mubr.f32.mxu0 %v453
  %693 = vmatmul.mubr.f32.gmra.mxu0 %v202
  %v694 = vpop.f32.mrf.mxu0
  %v695 = vadd.f32 0.0, %v694
  %v696 = vpop.f32.mrf.mxu0
  %v697 = vadd.f32 0.0, %v696
  %698 = vmatprep.mubr.f32.mxu0 %v456
  %699 = vmatmul.mubr.f32.gmra.mxu0 %v204
  %v700 = vpop.f32.mrf.mxu0
  %v701 = vadd.f32 0.0, %v700
  %v702 = vpop.f32.mrf.mxu0
  %v703 = vadd.f32 0.0, %v702
  %704 = vmatprep.mubr.f32.mxu0 %v459
  %705 = vmatmul.mubr.f32.gmra.mxu0 %v206
  %v706 = vpop.f32.mrf.mxu0
  %v707 = vadd.f32 0.0, %v706
  %v708 = vpop.f32.mrf.mxu0
  %v709 = vadd.f32 0.0, %v708
  %710 = vmatprep.mubr.f32.mxu0 %v462
  %711 = vmatmul.mubr.f32.gmra.mxu0 %v208
  %v712 = vpop.f32.mrf.mxu0
  %v713 = vadd.f32 0.0, %v712
  %v714 = vpop.f32.mrf.mxu0
  %v715 = vadd.f32 0.0, %v714
  %716 = vmatprep.mubr.f32.mxu0 %v465
  %717 = vmatmul.mubr.f32.gmra.mxu0 %v210
  %v718 = vpop.f32.mrf.mxu0
  %v719 = vadd.f32 0.0, %v718
  %v720 = vpop.f32.mrf.mxu0
  %v721 = vadd.f32 0.0, %v720
  %722 = vmatprep.mubr.f32.mxu0 %v468
  %723 = vmatmul.mubr.f32.gmra.mxu0 %v212
  %v724 = vpop.f32.mrf.mxu0
  %v725 = vadd.f32 0.0, %v724
  %v726 = vpop.f32.mrf.mxu0
  %v727 = vadd.f32 0.0, %v726
  %728 = vmatprep.mubr.f32.mxu0 %v471
  %729 = vmatmul.mubr.f32.gmra.mxu0 %v214
  %v730 = vpop.f32.mrf.mxu0
  %v731 = vadd.f32 0.0, %v730
  %v732 = vpop.f32.mrf.mxu0
  %v733 = vadd.f32 0.0, %v732
  %734 = vmatprep.mubr.f32.mxu0 %v474
  %735 = vmatmul.mubr.f32.gmra.mxu0 %v216
  %v736 = vpop.f32.mrf.mxu0
  %v737 = vadd.f32 0.0, %v736
  %v738 = vpop.f32.mrf.mxu0
  %v739 = vadd.f32 0.0, %v738
  %740 = vmatprep.mubr.f32.mxu0 %v477
  %741 = vmatmul.mubr.f32.gmra.mxu0 %v218
  %v742 = vpop.f32.mrf.mxu0
  %v743 = vadd.f32 0.0, %v742
  %v744 = vpop.f32.mrf.mxu0
  %v745 = vadd.f32 0.0, %v744
  %746 = vmatprep.mubr.f32.mxu0 %v480
  %747 = vmatmul.mubr.f32.gmra.mxu0 %v220
  %v748 = vpop.f32.mrf.mxu0
  %v749 = vadd.f32 0.0, %v748
  %v750 = vpop.f32.mrf.mxu0
  %v751 = vadd.f32 0.0, %v750
  %752 = vmatprep.mubr.f32.mxu0 %v483
  %753 = vmatmul.mubr.f32.gmra.mxu0 %v222
  %v754 = vpop.f32.mrf.mxu0
  %v755 = vadd.f32 0.0, %v754
  %v756 = vpop.f32.mrf.mxu0
  %v757 = vadd.f32 0.0, %v756
  %758 = vdwg.mxu0
  %v759 = vld [vmem:[%s4] sm:$0xff]
  %v760 = vld [vmem:[%s4 + $0x8] sm:$0xff]
  %v761 = vld [vmem:[%s4 + $0x10] sm:$0xff]
  %v762 = vld [vmem:[%s4 + $0x18] sm:$0xff]
  %v763 = vld [vmem:[%s4 + $0x20] sm:$0xff]
  %v764 = vld [vmem:[%s4 + $0x28] sm:$0xff]
  %v765 = vld [vmem:[%s4 + $0x30] sm:$0xff]
  %v766 = vld [vmem:[%s4 + $0x38] sm:$0xff]
  %v767 = vld [vmem:[%s4 + $0x40] sm:$0xff]
  %v768 = vld [vmem:[%s4 + $0x48] sm:$0xff]
  %v769 = vld [vmem:[%s4 + $0x50] sm:$0xff]
  %v770 = vld [vmem:[%s4 + $0x58] sm:$0xff]
  %v771 = vld [vmem:[%s5] sm:$0xff]
  %v772 = vld [vmem:[%s5 + $0x8] sm:$0xff]
  %v773 = vld [vmem:[%s5 + $0x10] sm:$0xff]
  %v774 = vld [vmem:[%s5 + $0x18] sm:$0xff]
  %v775 = vld [vmem:[%s5 + $0x20] sm:$0xff]
  %v776 = vld [vmem:[%s5 + $0x28] sm:$0xff]
  %v777 = vld [vmem:[%s5 + $0x30] sm:$0xff]
  %v778 = vld [vmem:[%s5 + $0x38] sm:$0xff]
  %v779 = vld [vmem:[%s5 + $0x40] sm:$0xff]
  %v780 = vld [vmem:[%s5 + $0x48] sm:$0xff]
  %v781 = vld [vmem:[%s5 + $0x50] sm:$0xff]
  %v782 = vld [vmem:[%s5 + $0x58] sm:$0xff]
  %v783 = vld [vmem:[%s5 + $0x60] sm:$0xff]
  %v784 = vld [vmem:[%s5 + $0x68] sm:$0xff]
  %v785 = vld [vmem:[%s5 + $0x70] sm:$0xff]
  %v786 = vld [vmem:[%s5 + $0x78] sm:$0xff]
  %v787 = vld [vmem:[%s5 + $0x80] sm:$0xff]
  %v788 = vld [vmem:[%s5 + $0x88] sm:$0xff]
  %v789 = vld [vmem:[%s5 + $0x90] sm:$0xff]
  %v790 = vld [vmem:[%s5 + $0x98] sm:$0xff]
  %v791 = vld [vmem:[%s5 + $0xa0] sm:$0xff]
  %v792 = vld [vmem:[%s5 + $0xa8] sm:$0xff]
  %v793 = vld [vmem:[%s5 + $0xb0] sm:$0xff]
  %v794 = vld [vmem:[%s5 + $0xb8] sm:$0xff]
  %v795 = vld [vmem:[%s5 + $0xc0] sm:$0xff]
  %v796 = vld [vmem:[%s5 + $0xc8] sm:$0xff]
  %v797 = vld [vmem:[%s5 + $0xd0] sm:$0xff]
  %v798 = vld [vmem:[%s5 + $0xd8] sm:$0xff]
  %v799 = vld [vmem:[%s5 + $0xe0] sm:$0xff]
  %v800 = vld [vmem:[%s5 + $0xe8] sm:$0xff]
  %v801 = vld [vmem:[%s5 + $0xf0] sm:$0xff]
  %v802 = vld [vmem:[%s5 + $0xf8] sm:$0xff]
  %v803 = vld [vmem:[%s5 + $0x100] sm:$0xff]
  %v804 = vld [vmem:[%s5 + $0x108] sm:$0xff]
  %v805 = vld [vmem:[%s5 + $0x110] sm:$0xff]
  %v806 = vld [vmem:[%s5 + $0x118] sm:$0xff]
  %v807 = vld [vmem:[%s5 + $0x120] sm:$0xff]
  %v808 = vld [vmem:[%s5 + $0x128] sm:$0xff]
  %v809 = vld [vmem:[%s5 + $0x130] sm:$0xff]
  %v810 = vld [vmem:[%s5 + $0x138] sm:$0xff]
  %v811 = vld [vmem:[%s5 + $0x140] sm:$0xff]
  %v812 = vld [vmem:[%s5 + $0x148] sm:$0xff]
  %v813 = vld [vmem:[%s5 + $0x150] sm:$0xff]
  %v814 = vld [vmem:[%s5 + $0x158] sm:$0xff]
  %v815 = vld [vmem:[%s5 + $0x160] sm:$0xff]
  %v816 = vld [vmem:[%s5 + $0x168] sm:$0xff]
  %v817 = vld [vmem:[%s5 + $0x170] sm:$0xff]
  %v818 = vld [vmem:[%s5 + $0x178] sm:$0xff]
  %v819 = vld [vmem:[%s5 + $0x180] sm:$0xff]
  %v820 = vld [vmem:[%s5 + $0x188] sm:$0xff]
  %v821 = vld [vmem:[%s5 + $0x190] sm:$0xff]
  %v822 = vld [vmem:[%s5 + $0x198] sm:$0xff]
  %v823 = vld [vmem:[%s5 + $0x1a0] sm:$0xff]
  %v824 = vld [vmem:[%s5 + $0x1a8] sm:$0xff]
  %v825 = vld [vmem:[%s5 + $0x1b0] sm:$0xff]
  %v826 = vld [vmem:[%s5 + $0x1b8] sm:$0xff]
  %v827 = vld [vmem:[%s5 + $0x1c0] sm:$0xff]
  %v828 = vld [vmem:[%s5 + $0x1c8] sm:$0xff]
  %v829 = vld [vmem:[%s5 + $0x1d0] sm:$0xff]
  %v830 = vld [vmem:[%s5 + $0x1d8] sm:$0xff]
  %v831 = vld [vmem:[%s5 + $0x1e0] sm:$0xff]
  %v832 = vld [vmem:[%s5 + $0x1e8] sm:$0xff]
  %v833 = vld [vmem:[%s5 + $0x1f0] sm:$0xff]
  %v834 = vld [vmem:[%s5 + $0x1f8] sm:$0xff]
  %v835 = vld [vmem:[%s5 + $0x200] sm:$0xff]
  %v836 = vld [vmem:[%s5 + $0x208] sm:$0xff]
  %v837 = vld [vmem:[%s5 + $0x210] sm:$0xff]
  %v838 = vld [vmem:[%s5 + $0x218] sm:$0xff]
  %v839 = vld [vmem:[%s5 + $0x220] sm:$0xff]
  %v840 = vld [vmem:[%s5 + $0x228] sm:$0xff]
  %v841 = vld [vmem:[%s5 + $0x230] sm:$0xff]
  %v842 = vld [vmem:[%s5 + $0x238] sm:$0xff]
  %v843 = vld [vmem:[%s5 + $0x240] sm:$0xff]
  %v844 = vld [vmem:[%s5 + $0x248] sm:$0xff]
  %v845 = vld [vmem:[%s5 + $0x250] sm:$0xff]
  %v846 = vld [vmem:[%s5 + $0x258] sm:$0xff]
  %v847 = vld [vmem:[%s5 + $0x260] sm:$0xff]
  %v848 = vld [vmem:[%s5 + $0x268] sm:$0xff]
  %v849 = vld [vmem:[%s5 + $0x270] sm:$0xff]
  %v850 = vld [vmem:[%s5 + $0x278] sm:$0xff]
  %v851 = vld [vmem:[%s5 + $0x280] sm:$0xff]
  %v852 = vld [vmem:[%s5 + $0x288] sm:$0xff]
  %v853 = vld [vmem:[%s5 + $0x290] sm:$0xff]
  %v854 = vld [vmem:[%s5 + $0x298] sm:$0xff]
  %v855 = vld [vmem:[%s5 + $0x2a0] sm:$0xff]
  %v856 = vld [vmem:[%s5 + $0x2a8] sm:$0xff]
  %v857 = vld [vmem:[%s5 + $0x2b0] sm:$0xff]
  %v858 = vld [vmem:[%s5 + $0x2b8] sm:$0xff]
  %v859 = vld [vmem:[%s5 + $0x2c0] sm:$0xff]
  %v860 = vld [vmem:[%s5 + $0x2c8] sm:$0xff]
  %v861 = vld [vmem:[%s5 + $0x2d0] sm:$0xff]
  %v862 = vld [vmem:[%s5 + $0x2d8] sm:$0xff]
  %v863 = vld [vmem:[%s5 + $0x2e0] sm:$0xff]
  %v864 = vld [vmem:[%s5 + $0x2e8] sm:$0xff]
  %v865 = vld [vmem:[%s5 + $0x2f0] sm:$0xff]
  %v866 = vld [vmem:[%s5 + $0x2f8] sm:$0xff]
  %v867 = vld [vmem:[%s5 + $0x300] sm:$0xff]
  %v868 = vld [vmem:[%s5 + $0x308] sm:$0xff]
  %v869 = vld [vmem:[%s5 + $0x310] sm:$0xff]
  %v870 = vld [vmem:[%s5 + $0x318] sm:$0xff]
  %v871 = vld [vmem:[%s5 + $0x320] sm:$0xff]
  %v872 = vld [vmem:[%s5 + $0x328] sm:$0xff]
  %v873 = vld [vmem:[%s5 + $0x330] sm:$0xff]
  %v874 = vld [vmem:[%s5 + $0x338] sm:$0xff]
  %v875 = vld [vmem:[%s5 + $0x340] sm:$0xff]
  %v876 = vld [vmem:[%s5 + $0x348] sm:$0xff]
  %v877 = vld [vmem:[%s5 + $0x350] sm:$0xff]
  %v878 = vld [vmem:[%s5 + $0x358] sm:$0xff]
  %v879 = vld [vmem:[%s5 + $0x360] sm:$0xff]
  %v880 = vld [vmem:[%s5 + $0x368] sm:$0xff]
  %v881 = vld [vmem:[%s5 + $0x370] sm:$0xf]
  %v882 = vld [vmem:[%s5 + $0x378] sm:$0xf]
  %vm883 = vcmask 490496
  %v885 = vsel %vm883, %v691, 0
  %v888 = vsel %vm883, %v697, 0
  %v891 = vsel %vm883, %v703, 0
  %v894 = vsel %vm883, %v709, 0
  %v897 = vsel %vm883, %v715, 0
  %v900 = vsel %vm883, %v721, 0
  %v903 = vsel %vm883, %v727, 0
  %v906 = vsel %vm883, %v733, 0
  %v909 = vsel %vm883, %v739, 0
  %v912 = vsel %vm883, %v745, 0
  %v915 = vsel %vm883, %v751, 0
  %v918 = vsel %vm883, %v757, 0
  %vm920 = vcmask 1043456
  %v922 = vsel %vm920, %v881, 0
  %v925 = vsel %vm920, %v882, 0
  %927 = vmatprep.subr.mxu0 %v802
  %928 = vmatpush1.msra.mxu0 %v801
  %929 = vmatprep.subr.mxu0 %v800
  %930 = vmatpush1.msra.mxu0 %v799
  %931 = vmatprep.subr.mxu0 %v798
  %932 = vmatpush1.msra.mxu0 %v797
  %933 = vmatprep.subr.mxu0 %v796
  %934 = vmatpush1.msra.mxu0 %v795
  %935 = vmatprep.subr.mxu0 %v794
  %936 = vmatpush1.msra.mxu0 %v793
  %937 = vmatprep.subr.mxu0 %v792
  %938 = vmatpush1.msra.mxu0 %v791
  %939 = vmatprep.subr.mxu0 %v790
  %940 = vmatpush1.msra.mxu0 %v789
  %941 = vmatprep.subr.mxu0 %v788
  %942 = vmatpush1.msra.mxu0 %v787
  %943 = vmatprep.subr.mxu0 %v786
  %944 = vmatpush1.msra.mxu0 %v785
  %945 = vmatprep.subr.mxu0 %v784
  %946 = vmatpush1.msra.mxu0 %v783
  %947 = vmatprep.subr.mxu0 %v782
  %948 = vmatpush1.msra.mxu0 %v781
  %949 = vmatprep.subr.mxu0 %v780
  %950 = vmatpush1.msra.mxu0 %v779
  %951 = vmatprep.subr.mxu0 %v778
  %952 = vmatpush1.msra.mxu0 %v777
  %953 = vmatprep.subr.mxu0 %v776
  %954 = vmatpush1.msra.mxu0 %v775
  %955 = vmatprep.subr.mxu0 %v774
  %956 = vmatpush1.msra.mxu0 %v773
  %957 = vmatprep.subr.mxu0 %v772
  %958 = vmatpush1.msra.mxu0 %v771
  %959 = vmatprep.subr.mxu0 %v834
  %960 = vmatpush2.msra.mxu0 %v833
  %961 = vmatprep.subr.mxu0 %v832
  %962 = vmatpush2.msra.mxu0 %v831
  %963 = vmatprep.subr.mxu0 %v830
  %964 = vmatpush2.msra.mxu0 %v829
  %965 = vmatprep.subr.mxu0 %v828
  %966 = vmatpush2.msra.mxu0 %v827
  %967 = vmatprep.subr.mxu0 %v826
  %968 = vmatpush2.msra.mxu0 %v825
  %969 = vmatprep.subr.mxu0 %v824
  %970 = vmatpush2.msra.mxu0 %v823
  %971 = vmatprep.subr.mxu0 %v822
  %972 = vmatpush2.msra.mxu0 %v821
  %973 = vmatprep.subr.mxu0 %v820
  %974 = vmatpush2.msra.mxu0 %v819
  %975 = vmatprep.subr.mxu0 %v818
  %976 = vmatpush2.msra.mxu0 %v817
  %977 = vmatprep.subr.mxu0 %v816
  %978 = vmatpush2.msra.mxu0 %v815
  %979 = vmatprep.subr.mxu0 %v814
  %980 = vmatpush2.msra.mxu0 %v813
  %981 = vmatprep.subr.mxu0 %v812
  %982 = vmatpush2.msra.mxu0 %v811
  %983 = vmatprep.subr.mxu0 %v810
  %984 = vmatpush2.msra.mxu0 %v809
  %985 = vmatprep.subr.mxu0 %v808
  %986 = vmatpush2.msra.mxu0 %v807
  %987 = vmatprep.subr.mxu0 %v806
  %988 = vmatpush2.msra.mxu0 %v805
  %989 = vmatprep.subr.mxu0 %v804
  %990 = vmatpush2.msra.mxu0 %v803
  %991 = vmatprep.mubr.f32.mxu0 %v554
  %992 = vmatmul.mubr.f32.gmra.mxu0 %v552
  %v993 = vpop.f32.mrf.mxu0
  %v994 = vadd.f32 0.0, %v993
  %v995 = vpop.f32.mrf.mxu0
  %v996 = vadd.f32 0.0, %v995
  %997 = vmatprep.mubr.f32.mxu0 %v560
  %998 = vmatmul.mubr.f32.gmra.mxu0 %v558
  %v999 = vpop.f32.mrf.mxu0
  %v1000 = vadd.f32 0.0, %v999
  %v1001 = vpop.f32.mrf.mxu0
  %v1002 = vadd.f32 0.0, %v1001
  %1003 = vmatprep.mubr.f32.mxu0 %v566
  %1004 = vmatmul.mubr.f32.gmra.mxu0 %v564
  %v1005 = vpop.f32.mrf.mxu0
  %v1006 = vadd.f32 0.0, %v1005
  %v1007 = vpop.f32.mrf.mxu0
  %v1008 = vadd.f32 0.0, %v1007
  %1009 = vmatprep.mubr.f32.mxu0 %v572
  %1010 = vmatmul.mubr.f32.gmra.mxu0 %v570
  %v1011 = vpop.f32.mrf.mxu0
  %v1012 = vadd.f32 0.0, %v1011
  %v1013 = vpop.f32.mrf.mxu0
  %v1014 = vadd.f32 0.0, %v1013
  %1015 = vmatprep.mubr.f32.mxu0 %v578
  %1016 = vmatmul.mubr.f32.gmra.mxu0 %v576
  %v1017 = vpop.f32.mrf.mxu0
  %v1018 = vadd.f32 0.0, %v1017
  %v1019 = vpop.f32.mrf.mxu0
  %v1020 = vadd.f32 0.0, %v1019
  %1021 = vmatprep.mubr.f32.mxu0 %v584
  %1022 = vmatmul.mubr.f32.gmra.mxu0 %v582
  %v1023 = vpop.f32.mrf.mxu0
  %v1024 = vadd.f32 0.0, %v1023
  %v1025 = vpop.f32.mrf.mxu0
  %v1026 = vadd.f32 0.0, %v1025
  %1027 = vmatprep.mubr.f32.mxu0 %v590
  %1028 = vmatmul.mubr.f32.gmra.mxu0 %v588
  %v1029 = vpop.f32.mrf.mxu0
  %v1030 = vadd.f32 0.0, %v1029
  %v1031 = vpop.f32.mrf.mxu0
  %v1032 = vadd.f32 0.0, %v1031
  %1033 = vmatprep.mubr.f32.mxu0 %v596
  %1034 = vmatmul.mubr.f32.gmra.mxu0 %v594
  %v1035 = vpop.f32.mrf.mxu0
  %v1036 = vadd.f32 0.0, %v1035
  %v1037 = vpop.f32.mrf.mxu0
  %v1038 = vadd.f32 0.0, %v1037
  %1039 = vmatprep.mubr.f32.mxu0 %v602
  %1040 = vmatmul.mubr.f32.gmra.mxu0 %v600
  %v1041 = vpop.f32.mrf.mxu0
  %v1042 = vadd.f32 0.0, %v1041
  %v1043 = vpop.f32.mrf.mxu0
  %v1044 = vadd.f32 0.0, %v1043
  %1045 = vmatprep.mubr.f32.mxu0 %v608
  %1046 = vmatmul.mubr.f32.gmra.mxu0 %v606
  %v1047 = vpop.f32.mrf.mxu0
  %v1048 = vadd.f32 0.0, %v1047
  %v1049 = vpop.f32.mrf.mxu0
  %v1050 = vadd.f32 0.0, %v1049
  %1051 = vmatprep.mubr.f32.mxu0 %v614
  %1052 = vmatmul.mubr.f32.gmra.mxu0 %v612
  %v1053 = vpop.f32.mrf.mxu0
  %v1054 = vadd.f32 0.0, %v1053
  %v1055 = vpop.f32.mrf.mxu0
  %v1056 = vadd.f32 0.0, %v1055
  %1057 = vmatprep.mubr.f32.mxu0 %v620
  %1058 = vmatmul.mubr.f32.gmra.mxu0 %v618
  %v1059 = vpop.f32.mrf.mxu0
  %v1060 = vadd.f32 0.0, %v1059
  %v1061 = vpop.f32.mrf.mxu0
  %v1062 = vadd.f32 0.0, %v1061
  %1063 = vdwg.mxu0
  %1064 = vmatprep.subr.mxu0 %v866
  %1065 = vmatpush1.msra.mxu0 %v865
  %1066 = vmatprep.subr.mxu0 %v864
  %1067 = vmatpush1.msra.mxu0 %v863
  %1068 = vmatprep.subr.mxu0 %v862
  %1069 = vmatpush1.msra.mxu0 %v861
  %1070 = vmatprep.subr.mxu0 %v860
  %1071 = vmatpush1.msra.mxu0 %v859
  %1072 = vmatprep.subr.mxu0 %v858
  %1073 = vmatpush1.msra.mxu0 %v857
  %1074 = vmatprep.subr.mxu0 %v856
  %1075 = vmatpush1.msra.mxu0 %v855
  %1076 = vmatprep.subr.mxu0 %v854
  %1077 = vmatpush1.msra.mxu0 %v853
  %1078 = vmatprep.subr.mxu0 %v852
  %1079 = vmatpush1.msra.mxu0 %v851
  %1080 = vmatprep.subr.mxu0 %v850
  %1081 = vmatpush1.msra.mxu0 %v849
  %1082 = vmatprep.subr.mxu0 %v848
  %1083 = vmatpush1.msra.mxu0 %v847
  %1084 = vmatprep.subr.mxu0 %v846
  %1085 = vmatpush1.msra.mxu0 %v845
  %1086 = vmatprep.subr.mxu0 %v844
  %1087 = vmatpush1.msra.mxu0 %v843
  %1088 = vmatprep.subr.mxu0 %v842
  %1089 = vmatpush1.msra.mxu0 %v841
  %1090 = vmatprep.subr.mxu0 %v840
  %1091 = vmatpush1.msra.mxu0 %v839
  %1092 = vmatprep.subr.mxu0 %v838
  %1093 = vmatpush1.msra.mxu0 %v837
  %1094 = vmatprep.subr.mxu0 %v836
  %1095 = vmatpush1.msra.mxu0 %v835
  %1096 = vmatprep.subr.mxu0 0.0
  %1097 = vmatpush2.msra.mxu0 0.0
  %1098 = vmatprep.subr.mxu0 0.0
  %1099 = vmatpush2.msra.mxu0 0.0
  %1100 = vmatprep.subr.mxu0 0.0
  %1101 = vmatpush2.msra.mxu0 0.0
  %1102 = vmatprep.subr.mxu0 0.0
  %1103 = vmatpush2.msra.mxu0 0.0
  %1104 = vmatprep.subr.mxu0 0.0
  %1105 = vmatpush2.msra.mxu0 0.0
  %1106 = vmatprep.subr.mxu0 0.0
  %1107 = vmatpush2.msra.mxu0 0.0
  %1108 = vmatprep.subr.mxu0 0.0
  %1109 = vmatpush2.msra.mxu0 0.0
  %1110 = vmatprep.subr.mxu0 0.0
  %1111 = vmatpush2.msra.mxu0 0.0
  %1112 = vmatprep.subr.mxu0 %v925
  %1113 = vmatpush2.msra.mxu0 %v922
  %1114 = vmatprep.subr.mxu0 %v880
  %1115 = vmatpush2.msra.mxu0 %v879
  %1116 = vmatprep.subr.mxu0 %v878
  %1117 = vmatpush2.msra.mxu0 %v877
  %1118 = vmatprep.subr.mxu0 %v876
  %1119 = vmatpush2.msra.mxu0 %v875
  %1120 = vmatprep.subr.mxu0 %v874
  %1121 = vmatpush2.msra.mxu0 %v873
  %1122 = vmatprep.subr.mxu0 %v872
  %1123 = vmatpush2.msra.mxu0 %v871
  %1124 = vmatprep.subr.mxu0 %v870
  %1125 = vmatpush2.msra.mxu0 %v869
  %1126 = vmatprep.subr.mxu0 %v868
  %1127 = vmatpush2.msra.mxu0 %v867
  %1128 = vmatprep.mubr.f32.mxu0 %v885
  %1129 = vmatmul.mubr.f32.gmra.mxu0 %v689
  %v1130 = vpop.f32.mrf.mxu0
  %v1131 = vadd.f32 %v994, %v1130
  %v1132 = vpop.f32.mrf.mxu0
  %v1133 = vadd.f32 %v996, %v1132
  %1134 = vmatprep.mubr.f32.mxu0 %v888
  %1135 = vmatmul.mubr.f32.gmra.mxu0 %v695
  %v1136 = vpop.f32.mrf.mxu0
  %v1137 = vadd.f32 %v1000, %v1136
  %v1138 = vpop.f32.mrf.mxu0
  %v1139 = vadd.f32 %v1002, %v1138
  %1140 = vmatprep.mubr.f32.mxu0 %v891
  %1141 = vmatmul.mubr.f32.gmra.mxu0 %v701
  %v1142 = vpop.f32.mrf.mxu0
  %v1143 = vadd.f32 %v1006, %v1142
  %v1144 = vpop.f32.mrf.mxu0
  %v1145 = vadd.f32 %v1008, %v1144
  %1146 = vmatprep.mubr.f32.mxu0 %v894
  %1147 = vmatmul.mubr.f32.gmra.mxu0 %v707
  %v1148 = vpop.f32.mrf.mxu0
  %v1149 = vadd.f32 %v1012, %v1148
  %v1150 = vpop.f32.mrf.mxu0
  %v1151 = vadd.f32 %v1014, %v1150
  %1152 = vmatprep.mubr.f32.mxu0 %v897
  %1153 = vmatmul.mubr.f32.gmra.mxu0 %v713
  %v1154 = vpop.f32.mrf.mxu0
  %v1155 = vadd.f32 %v1018, %v1154
  %v1156 = vpop.f32.mrf.mxu0
  %v1157 = vadd.f32 %v1020, %v1156
  %1158 = vmatprep.mubr.f32.mxu0 %v900
  %1159 = vmatmul.mubr.f32.gmra.mxu0 %v719
  %v1160 = vpop.f32.mrf.mxu0
  %v1161 = vadd.f32 %v1024, %v1160
  %v1162 = vpop.f32.mrf.mxu0
  %v1163 = vadd.f32 %v1026, %v1162
  %1164 = vmatprep.mubr.f32.mxu0 %v903
  %1165 = vmatmul.mubr.f32.gmra.mxu0 %v725
  %v1166 = vpop.f32.mrf.mxu0
  %v1167 = vadd.f32 %v1030, %v1166
  %v1168 = vpop.f32.mrf.mxu0
  %v1169 = vadd.f32 %v1032, %v1168
  %1170 = vmatprep.mubr.f32.mxu0 %v906
  %1171 = vmatmul.mubr.f32.gmra.mxu0 %v731
  %v1172 = vpop.f32.mrf.mxu0
  %v1173 = vadd.f32 %v1036, %v1172
  %v1174 = vpop.f32.mrf.mxu0
  %v1175 = vadd.f32 %v1038, %v1174
  %1176 = vmatprep.mubr.f32.mxu0 %v909
  %1177 = vmatmul.mubr.f32.gmra.mxu0 %v737
  %v1178 = vpop.f32.mrf.mxu0
  %v1179 = vadd.f32 %v1042, %v1178
  %v1180 = vpop.f32.mrf.mxu0
  %v1181 = vadd.f32 %v1044, %v1180
  %1182 = vmatprep.mubr.f32.mxu0 %v912
  %1183 = vmatmul.mubr.f32.gmra.mxu0 %v743
  %v1184 = vpop.f32.mrf.mxu0
  %v1185 = vadd.f32 %v1048, %v1184
  %v1186 = vpop.f32.mrf.mxu0
  %v1187 = vadd.f32 %v1050, %v1186
  %1188 = vmatprep.mubr.f32.mxu0 %v915
  %1189 = vmatmul.mubr.f32.gmra.mxu0 %v749
  %v1190 = vpop.f32.mrf.mxu0
  %v1191 = vadd.f32 %v1054, %v1190
  %v1192 = vpop.f32.mrf.mxu0
  %v1193 = vadd.f32 %v1056, %v1192
  %1194 = vmatprep.mubr.f32.mxu0 %v918
  %1195 = vmatmul.mubr.f32.gmra.mxu0 %v755
  %v1196 = vpop.f32.mrf.mxu0
  %v1197 = vadd.f32 %v1060, %v1196
  %v1198 = vpop.f32.mrf.mxu0
  %v1199 = vadd.f32 %v1062, %v1198
  %1200 = vdwg.mxu0
  %vm1201 = vcmask 392192
  %v1203 = vsel %vm1201, %v142, 0
  %v1206 = vsel %vm1201, %v147, 0
  %v1209 = vsel %vm1201, %v152, 0
  %v1212 = vsel %vm1201, %v157, 0
  %v1215 = vsel %vm1201, %v162, 0
  %v1218 = vsel %vm1201, %v167, 0
  %v1221 = vsel %vm1201, %v172, 0
  %v1224 = vsel %vm1201, %v177, 0
  %v1227 = vsel %vm1201, %v182, 0
  %v1230 = vsel %vm1201, %v187, 0
  %v1233 = vsel %vm1201, %v192, 0
  %v1236 = vsel %vm1201, %v197, 0
  %1238 = vmatprep.subr.mxu0 0.0
  %1239 = vmatpush1.msra.mxu0 0.0
  %1240 = vmatprep.subr.mxu0 0.0
  %1241 = vmatpush1.msra.mxu0 0.0
  %1242 = vmatprep.subr.mxu0 0.0
  %1243 = vmatpush1.msra.mxu0 0.0
  %1244 = vmatprep.subr.mxu0 0.0
  %1245 = vmatpush1.msra.mxu0 0.0
  %1246 = vmatprep.subr.mxu0 0.0
  %1247 = vmatpush1.msra.mxu0 0.0
  %1248 = vmatprep.subr.mxu0 0.0
  %1249 = vmatpush1.msra.mxu0 0.0
  %1250 = vmatprep.subr.mxu0 0.0
  %1251 = vmatpush1.msra.mxu0 0.0
  %1252 = vmatprep.subr.mxu0 0.0
  %1253 = vmatpush1.msra.mxu0 0.0
  %1254 = vmatprep.subr.mxu0 0.0
  %1255 = vmatpush1.msra.mxu0 0.0
  %1256 = vmatprep.subr.mxu0 0.0
  %1257 = vmatpush1.msra.mxu0 0.0
  %1258 = vmatprep.subr.mxu0 %v770
  %1259 = vmatpush1.msra.mxu0 %v769
  %1260 = vmatprep.subr.mxu0 %v768
  %1261 = vmatpush1.msra.mxu0 %v767
  %1262 = vmatprep.subr.mxu0 %v766
  %1263 = vmatpush1.msra.mxu0 %v765
  %1264 = vmatprep.subr.mxu0 %v764
  %1265 = vmatpush1.msra.mxu0 %v763
  %1266 = vmatprep.subr.mxu0 %v762
  %1267 = vmatpush1.msra.mxu0 %v761
  %1268 = vmatprep.subr.mxu0 %v760
  %1269 = vmatpush1.msra.mxu0 %v759
  %1270 = vmatprep.subr.mxu0 0.0
  %1271 = vmatpush2.msra.mxu0 0.0
  %1272 = vmatprep.subr.mxu0 0.0
  %1273 = vmatpush2.msra.mxu0 0.0
  %1274 = vmatprep.subr.mxu0 0.0
  %1275 = vmatpush2.msra.mxu0 0.0
  %1276 = vmatprep.subr.mxu0 0.0
  %1277 = vmatpush2.msra.mxu0 0.0
  %1278 = vmatprep.subr.mxu0 0.0
  %1279 = vmatpush2.msra.mxu0 0.0
  %1280 = vmatprep.subr.mxu0 0.0
  %1281 = vmatpush2.msra.mxu0 0.0
  %1282 = vmatprep.subr.mxu0 0.0
  %1283 = vmatpush2.msra.mxu0 0.0
  %1284 = vmatprep.subr.mxu0 0.0
  %1285 = vmatpush2.msra.mxu0 0.0
  %1286 = vmatprep.subr.mxu0 0.0
  %1287 = vmatpush2.msra.mxu0 0.0
  %1288 = vmatprep.subr.mxu0 0.0
  %1289 = vmatpush2.msra.mxu0 0.0
  %1290 = vmatprep.subr.mxu0 0.0
  %1291 = vmatpush2.msra.mxu0 0.0
  %1292 = vmatprep.subr.mxu0 0.0
  %1293 = vmatpush2.msra.mxu0 0.0
  %1294 = vmatprep.subr.mxu0 0.0
  %1295 = vmatpush2.msra.mxu0 0.0
  %1296 = vmatprep.subr.mxu0 0.0
  %1297 = vmatpush2.msra.mxu0 0.0
  %1298 = vmatprep.subr.mxu0 0.0
  %1299 = vmatpush2.msra.mxu0 0.0
  %1300 = vmatprep.subr.mxu0 0.0
  %1301 = vmatpush2.msra.mxu0 0.0
  %1302 = vmatprep.mubr.f32.mxu0 0.0
  %1303 = vmatmul.mubr.f32.gmra.mxu0 %v1203
  %v1304 = vpop.f32.mrf.mxu0
  %v1305 = vadd.f32 %v1131, %v1304
  %v1306 = vpop.f32.mrf.mxu0
  %v1307 = vadd.f32 %v1133, %v1306
  %1308 = vmatprep.mubr.f32.mxu0 0.0
  %1309 = vmatmul.mubr.f32.gmra.mxu0 %v1206
  %v1310 = vpop.f32.mrf.mxu0
  %v1311 = vadd.f32 %v1137, %v1310
  %v1312 = vpop.f32.mrf.mxu0
  %v1313 = vadd.f32 %v1139, %v1312
  %1314 = vmatprep.mubr.f32.mxu0 0.0
  %1315 = vmatmul.mubr.f32.gmra.mxu0 %v1209
  %v1316 = vpop.f32.mrf.mxu0
  %v1317 = vadd.f32 %v1143, %v1316
  %v1318 = vpop.f32.mrf.mxu0
  %v1319 = vadd.f32 %v1145, %v1318
  %1320 = vmatprep.mubr.f32.mxu0 0.0
  %1321 = vmatmul.mubr.f32.gmra.mxu0 %v1212
  %v1322 = vpop.f32.mrf.mxu0
  %v1323 = vadd.f32 %v1149, %v1322
  %v1324 = vpop.f32.mrf.mxu0
  %v1325 = vadd.f32 %v1151, %v1324
  %1326 = vmatprep.mubr.f32.mxu0 0.0
  %1327 = vmatmul.mubr.f32.gmra.mxu0 %v1215
  %v1328 = vpop.f32.mrf.mxu0
  %v1329 = vadd.f32 %v1155, %v1328
  %v1330 = vpop.f32.mrf.mxu0
  %v1331 = vadd.f32 %v1157, %v1330
  %1332 = vmatprep.mubr.f32.mxu0 0.0
  %1333 = vmatmul.mubr.f32.gmra.mxu0 %v1218
  %v1334 = vpop.f32.mrf.mxu0
  %v1335 = vadd.f32 %v1161, %v1334
  %v1336 = vpop.f32.mrf.mxu0
  %v1337 = vadd.f32 %v1163, %v1336
  %1338 = vmatprep.mubr.f32.mxu0 0.0
  %1339 = vmatmul.mubr.f32.gmra.mxu0 %v1221
  %v1340 = vpop.f32.mrf.mxu0
  %v1341 = vadd.f32 %v1167, %v1340
  %v1342 = vpop.f32.mrf.mxu0
  %v1343 = vadd.f32 %v1169, %v1342
  %1344 = vmatprep.mubr.f32.mxu0 0.0
  %1345 = vmatmul.mubr.f32.gmra.mxu0 %v1224
  %v1346 = vpop.f32.mrf.mxu0
  %v1347 = vadd.f32 %v1173, %v1346
  %v1348 = vpop.f32.mrf.mxu0
  %v1349 = vadd.f32 %v1175, %v1348
  %1350 = vmatprep.mubr.f32.mxu0 0.0
  %1351 = vmatmul.mubr.f32.gmra.mxu0 %v1227
  %v1352 = vpop.f32.mrf.mxu0
  %v1353 = vadd.f32 %v1179, %v1352
  %v1354 = vpop.f32.mrf.mxu0
  %v1355 = vadd.f32 %v1181, %v1354
  %1356 = vmatprep.mubr.f32.mxu0 0.0
  %1357 = vmatmul.mubr.f32.gmra.mxu0 %v1230
  %v1358 = vpop.f32.mrf.mxu0
  %v1359 = vadd.f32 %v1185, %v1358
  %v1360 = vpop.f32.mrf.mxu0
  %v1361 = vadd.f32 %v1187, %v1360
  %1362 = vmatprep.mubr.f32.mxu0 0.0
  %1363 = vmatmul.mubr.f32.gmra.mxu0 %v1233
  %v1364 = vpop.f32.mrf.mxu0
  %v1365 = vadd.f32 %v1191, %v1364
  %v1366 = vpop.f32.mrf.mxu0
  %v1367 = vadd.f32 %v1193, %v1366
  %1368 = vmatprep.mubr.f32.mxu0 0.0
  %1369 = vmatmul.mubr.f32.gmra.mxu0 %v1236
  %v1370 = vpop.f32.mrf.mxu0
  %v1371 = vadd.f32 %v1197, %v1370
  %v1372 = vpop.f32.mrf.mxu0
  %v1373 = vadd.f32 %v1199, %v1372
  %1374 = vdwg.mxu0
  %1375 = vst [vmem:[%s6] sm:$0xff] %v1305
  %vm1376 = vcmask 523264
  %1377 = vst.msk [vmem:[%s6 + $0x8] sm:$0xff] %vm1376, %v1307
  %1378 = vst [vmem:[%s6 + $0x10] sm:$0xff] %v1311
  %1379 = vst.msk [vmem:[%s6 + $0x18] sm:$0xff] %vm1376, %v1313
  %1380 = vst [vmem:[%s6 + $0x20] sm:$0xff] %v1317
  %1381 = vst.msk [vmem:[%s6 + $0x28] sm:$0xff] %vm1376, %v1319
  %1382 = vst [vmem:[%s6 + $0x30] sm:$0xff] %v1323
  %1383 = vst.msk [vmem:[%s6 + $0x38] sm:$0xff] %vm1376, %v1325
  %1384 = vst [vmem:[%s6 + $0x40] sm:$0xff] %v1329
  %1385 = vst.msk [vmem:[%s6 + $0x48] sm:$0xff] %vm1376, %v1331
  %1386 = vst [vmem:[%s6 + $0x50] sm:$0xff] %v1335
  %1387 = vst.msk [vmem:[%s6 + $0x58] sm:$0xff] %vm1376, %v1337
  %1388 = vst [vmem:[%s6 + $0x60] sm:$0xff] %v1341
  %1389 = vst.msk [vmem:[%s6 + $0x68] sm:$0xff] %vm1376, %v1343
  %1390 = vst [vmem:[%s6 + $0x70] sm:$0xff] %v1347
  %1391 = vst.msk [vmem:[%s6 + $0x78] sm:$0xff] %vm1376, %v1349
  %1392 = vst [vmem:[%s6 + $0x80] sm:$0xff] %v1353
  %1393 = vst.msk [vmem:[%s6 + $0x88] sm:$0xff] %vm1376, %v1355
  %1394 = vst [vmem:[%s6 + $0x90] sm:$0xff] %v1359
  %1395 = vst.msk [vmem:[%s6 + $0x98] sm:$0xff] %vm1376, %v1361
  %1396 = vst [vmem:[%s6 + $0xa0] sm:$0xff] %v1365
  %1397 = vst.msk [vmem:[%s6 + $0xa8] sm:$0xff] %vm1376, %v1367
  %1398 = vst [vmem:[%s6 + $0xb0] sm:$0xff] %v1371
  %1399 = vst.msk [vmem:[%s6 + $0xb8] sm:$0xff] %vm1376, %v1373
  // Predicated region
  $region26: #{wave_generator_forward.1} parent=0 // pred_check
    _
  $region27: #{wave_generator_forward.1} parent=0 // pred_check_branch
    %1401 = sbr.rel (0) target = $region29
  $region28: #{wave_generator_forward.1} parent=0 // pred_region
    _
  $region29: #{wave_generator_forward.1} parent=0 // pred_fallthru
    _
  // Predicated region
  $region30: #{wave_generator_forward.1} parent=0 // pred_check
    _
  $region31: #{wave_generator_forward.1} parent=0 // pred_check_branch
    %1403 = sbr.rel (0) target = $region33
  $region32: #{wave_generator_forward.1} parent=0 // pred_region
    _
  $region33: #{wave_generator_forward.1} parent=0 // pred_fallthru
    _

</llo_original>
